<compile_context>
chip_gen: v7x
topology: tpu7x:2x2x1
jax: 0.10.0
libtpu: 0.0.40
codegen_flags: <defaults>
</compile_context>

<pallas_src>
import math

import jax
import jax.numpy as jnp
from jax.experimental import pallas as pl
from jax.experimental.pallas import tpu as pltpu

IN_FEATURES = 5      # true fc1 input dim (PyTorch module)
IN_PADDED = 8        # padded to a clean sublane multiple
H1 = 1024
H2 = 512
OUT_FEATURES = 2     # true fc3 output dim
OUT_PADDED = 128     # lane-dense padded output dim


def _round_up(x, m):
    return ((x + m - 1) // m) * m


def mlp_kernel(x_ref, w1_ref, b1_ref, w2_ref, b2_ref, w3_ref, b3_ref, o_ref):
    zero_bf16 = jnp.bfloat16(0)
    # fc1: bf16 x bf16 -> f32 accumulate on the MXU; bias in f32, relu in bf16.
    h1 = jnp.dot(x_ref[...], w1_ref[...], preferred_element_type=jnp.float32)
    h1 = jnp.maximum((h1 + b1_ref[...]).astype(jnp.bfloat16), zero_bf16)
    # fc2 + relu
    h2 = jnp.dot(h1, w2_ref[...], preferred_element_type=jnp.float32)
    h2 = jnp.maximum((h2 + b2_ref[...]).astype(jnp.bfloat16), zero_bf16)
    # fc3 (output padded to 128 lanes; the first 2 columns are the Q-values)
    out = jnp.dot(h2, w3_ref[...], preferred_element_type=jnp.float32)
    o_ref[...] = (out + b3_ref[...]).astype(o_ref.dtype)


def network_forward(x, params, *, tb_max=512):
    """x: (batch, 5) float32.  Returns (batch, 2) float32."""
    w1, b1, w2, b2, w3, b3 = params
    batch = x.shape[0]

    # Batch-tile selection: rows rounded to 16 (bf16 sublane packing).
    # Small batches -> one minimal tile; large batches -> 512-row tiles
    # (multiple of 256; >= 2 tiles, so the "parallel" axis shards across
    # v7x's two TensorCores).
    pb = _round_up(batch, 16)
    tb = pb if pb <= tb_max else tb_max
    padded_batch = _round_up(pb, tb)
    n_tiles = padded_batch // tb

    # Pad features 5 -> 8 and batch -> padded_batch; cast activations to bf16.
    xp = jnp.zeros((padded_batch, IN_PADDED), jnp.bfloat16)
    xp = xp.at[:batch, :IN_FEATURES].set(x.astype(jnp.bfloat16))

    def const(a):
        # Constant block index -> weight stays VMEM-resident across the grid.
        return pl.BlockSpec(a.shape, lambda i: (0,) * a.ndim)

    flops = 2 * padded_batch * (IN_PADDED * H1 + H1 * H2 + H2 * OUT_PADDED)
    bytes_accessed = (
        sum(int(a.size) * a.dtype.itemsize for a in (w1, b1, w2, b2, w3, b3))
        + int(xp.size) * xp.dtype.itemsize
        + padded_batch * OUT_PADDED * 4
    )

    out = pl.pallas_call(
        mlp_kernel,
        out_shape=jax.ShapeDtypeStruct((padded_batch, OUT_PADDED), jnp.float32),
        grid=(n_tiles,),
        in_specs=[
            pl.BlockSpec((tb, IN_PADDED), lambda i: (i, 0)),   # x: tiled over batch
            const(w1), const(b1),                              # weights/biases resident
            const(w2), const(b2),
            const(w3), const(b3),
        ],
        out_specs=pl.BlockSpec((tb, OUT_PADDED), lambda i: (i, 0)),
        compiler_params=pltpu.CompilerParams(
            dimension_semantics=("parallel",),
            vmem_limit_bytes=32 * 1024 * 1024),
        cost_estimate=pl.CostEstimate(
            flops=flops, transcendentals=0, bytes_accessed=bytes_accessed),
    )(xp, w1, b1, w2, b2, w3, b3)

    # TODO(synk): batch~8 action-selection calls are weight-DMA bound; a
    # cross-pallas_call weight-prefetch (semaphore/VMEM-ref future) would hide
    # that ~1 MB copy but needs persistent state across calls.
    return out[:batch, :OUT_FEATURES]


def init_params(key):
    """Mirror nn.Linear default init U(-1/sqrt(fan_in), 1/sqrt(fan_in)).

    Weights stored transposed vs. PyTorch, i.e. (in_features, out_features),
    in bfloat16; fc1 weight zero-padded to (8, 1024); fc3 weight/bias
    zero-padded to 128 output columns.  Biases f32 of shape (1, out)."""
    dims = [(IN_FEATURES, H1), (H1, H2), (H2, OUT_FEATURES)]
    params = []
    keys = jax.random.split(key, 2 * len(dims))
    for i, (fan_in, fan_out) in enumerate(dims):
        bound = 1.0 / math.sqrt(fan_in)
        w = jax.random.uniform(keys[2 * i], (fan_in, fan_out),
                               minval=-bound, maxval=bound, dtype=jnp.float32)
        b = jax.random.uniform(keys[2 * i + 1], (1, fan_out),
                               minval=-bound, maxval=bound, dtype=jnp.float32)
        if i == 0:
            w = jnp.pad(w, ((0, IN_PADDED - fan_in), (0, 0)))
        if i == 2:
            w = jnp.pad(w, ((0, 0), (0, OUT_PADDED - fan_out)))
            b = jnp.pad(b, ((0, 0), (0, OUT_PADDED - fan_out)))
        params.extend([w.astype(jnp.bfloat16), b])
    return tuple(params)


def reference_forward(x, params):
    """Pure-JAX reference mirroring the kernel's bf16 quantization points."""
    w1, b1, w2, b2, w3, b3 = params

    def bf16_dot(a, w):
        return jnp.dot(a.astype(jnp.bfloat16).astype(jnp.float32),
                       w.astype(jnp.float32))

    xp = jnp.pad(x, ((0, 0), (0, IN_PADDED - x.shape[1])))
    h1 = jnp.maximum(bf16_dot(xp, w1) + b1, 0.0)
    h2 = jnp.maximum(bf16_dot(h1, w2) + b2, 0.0)
    out = bf16_dot(h2, w3) + b3
    return out[:, :OUT_FEATURES]


if __name__ == "__main__":
    key = jax.random.PRNGKey(0)
    k_x1, k_x2, k_p = jax.random.split(key, 3)
    params = init_params(k_p)

    # Small batch (DQN action-selection path): single 16-row padded tile.
    x_small = jax.random.normal(k_x1, (2, IN_FEATURES), dtype=jnp.float32)
    out_small = jax.block_until_ready(network_forward(x_small, params))
    ref_small = reference_forward(x_small, params)
    assert out_small.shape == (2, OUT_FEATURES), out_small.shape
    assert jnp.allclose(out_small, ref_small, atol=1e-3, rtol=1e-3), "mismatch (batch=2)"

    # Larger batch exercising batch padding + the multi-tile grid (2 x 512 rows).
    x_big = jax.random.normal(k_x2, (640, IN_FEATURES), dtype=jnp.float32)
    out_big = jax.block_until_ready(network_forward(x_big, params))
    ref_big = reference_forward(x_big, params)
    assert out_big.shape == (640, OUT_FEATURES), out_big.shape
    assert jnp.allclose(out_big, ref_big, atol=1e-3, rtol=1e-3), "mismatch (batch=640)"

    print("KERNEL_OK")
</pallas_src>

<mosaic_0001>
module attributes {stable_mosaic.version = 11 : i64} {
  func.func @mlp_kernel(%arg0: i32, %arg1: memref<16x8xbf16, #tpu.memory_space<vmem>>, %arg2: memref<8x1024xbf16, #tpu.memory_space<vmem>>, %arg3: memref<1x1024xf32, #tpu.memory_space<vmem>>, %arg4: memref<1024x512xbf16, #tpu.memory_space<vmem>>, %arg5: memref<1x512xf32, #tpu.memory_space<vmem>>, %arg6: memref<512x128xbf16, #tpu.memory_space<vmem>>, %arg7: memref<1x128xf32, #tpu.memory_space<vmem>>, %arg8: memref<16x128xf32, #tpu.memory_space<vmem>>) attributes {dimension_semantics = [#tpu.dimension_semantics<parallel>], iteration_bounds = array<i64: 1>, scalar_prefetch = 0 : i64, scratch_operands = 0 : i64, tpu.core_type = #tpu.core_type<tc>, window_params = [{transform_indices = @transform_0, window_bounds = array<i64: 16, 8>}, {pipeline_mode = #tpu.pipeline_mode<synchronous>, transform_indices = @transform_1, window_bounds = array<i64: 8, 1024>}, {pipeline_mode = #tpu.pipeline_mode<synchronous>, transform_indices = @transform_2, window_bounds = array<i64: 1, 1024>}, {pipeline_mode = #tpu.pipeline_mode<synchronous>, transform_indices = @transform_3, window_bounds = array<i64: 1024, 512>}, {pipeline_mode = #tpu.pipeline_mode<synchronous>, transform_indices = @transform_4, window_bounds = array<i64: 1, 512>}, {pipeline_mode = #tpu.pipeline_mode<synchronous>, transform_indices = @transform_5, window_bounds = array<i64: 512, 128>}, {pipeline_mode = #tpu.pipeline_mode<synchronous>, transform_indices = @transform_6, window_bounds = array<i64: 1, 128>}, {transform_indices = @transform_7, window_bounds = array<i64: 16, 128>}]} {
    %c0 = arith.constant 0 : index
    %c0_0 = arith.constant 0 : index
    %0 = vector.load %arg1[%c0, %c0_0] : memref<16x8xbf16, #tpu.memory_space<vmem>>, vector<16x8xbf16>
    %c0_1 = arith.constant 0 : index
    %c0_2 = arith.constant 0 : index
    %1 = vector.load %arg2[%c0_1, %c0_2] : memref<8x1024xbf16, #tpu.memory_space<vmem>>, vector<8x1024xbf16>
    %cst = arith.constant dense<0.000000e+00> : vector<16x1024xf32>
    %2 = tpu.matmul %0, %1, %cst {dimension_numbers = #tpu.dot_dimension_numbers<[1], [0], [0], [1], [0, 0, 1, 1], [], []>} : vector<16x8xbf16>, vector<8x1024xbf16>, vector<16x1024xf32> -> vector<16x1024xf32>
    %c0_3 = arith.constant 0 : index
    %c0_4 = arith.constant 0 : index
    %3 = vector.load %arg3[%c0_3, %c0_4] : memref<1x1024xf32, #tpu.memory_space<vmem>>, vector<1x1024xf32>
    %4 = vector.broadcast %3 : vector<1x1024xf32> to vector<16x1024xf32>
    %5 = arith.addf %2, %4 : vector<16x1024xf32>
    %6 = arith.truncf %5 : vector<16x1024xf32> to vector<16x1024xbf16>
    %cst_5 = arith.constant 0.000000e+00 : bf16
    %7 = vector.broadcast %cst_5 : bf16 to vector<16x1024xbf16>
    %8 = arith.maximumf %6, %7 : vector<16x1024xbf16>
    %c0_6 = arith.constant 0 : index
    %c0_7 = arith.constant 0 : index
    %9 = vector.load %arg4[%c0_6, %c0_7] : memref<1024x512xbf16, #tpu.memory_space<vmem>>, vector<1024x512xbf16>
    %cst_8 = arith.constant dense<0.000000e+00> : vector<16x512xf32>
    %10 = tpu.matmul %8, %9, %cst_8 {dimension_numbers = #tpu.dot_dimension_numbers<[1], [0], [0], [1], [0, 0, 1, 1], [], []>} : vector<16x1024xbf16>, vector<1024x512xbf16>, vector<16x512xf32> -> vector<16x512xf32>
    %c0_9 = arith.constant 0 : index
    %c0_10 = arith.constant 0 : index
    %11 = vector.load %arg5[%c0_9, %c0_10] : memref<1x512xf32, #tpu.memory_space<vmem>>, vector<1x512xf32>
    %12 = vector.broadcast %11 : vector<1x512xf32> to vector<16x512xf32>
    %13 = arith.addf %10, %12 : vector<16x512xf32>
    %14 = arith.truncf %13 : vector<16x512xf32> to vector<16x512xbf16>
    %cst_11 = arith.constant 0.000000e+00 : bf16
    %15 = vector.broadcast %cst_11 : bf16 to vector<16x512xbf16>
    %16 = arith.maximumf %14, %15 : vector<16x512xbf16>
    %c0_12 = arith.constant 0 : index
    %c0_13 = arith.constant 0 : index
    %17 = vector.load %arg6[%c0_12, %c0_13] : memref<512x128xbf16, #tpu.memory_space<vmem>>, vector<512x128xbf16>
    %cst_14 = arith.constant dense<0.000000e+00> : vector<16x128xf32>
    %18 = tpu.matmul %16, %17, %cst_14 {dimension_numbers = #tpu.dot_dimension_numbers<[1], [0], [0], [1], [0, 0, 1, 1], [], []>} : vector<16x512xbf16>, vector<512x128xbf16>, vector<16x128xf32> -> vector<16x128xf32>
    %c0_15 = arith.constant 0 : index
    %c0_16 = arith.constant 0 : index
    %19 = vector.load %arg7[%c0_15, %c0_16] : memref<1x128xf32, #tpu.memory_space<vmem>>, vector<1x128xf32>
    %20 = vector.broadcast %19 : vector<1x128xf32> to vector<16x128xf32>
    %21 = arith.addf %18, %20 : vector<16x128xf32>
    %c0_17 = arith.constant 0 : index
    %c0_18 = arith.constant 0 : index
    %22 = vector.load %arg8[%c0_17, %c0_18] : memref<16x128xf32, #tpu.memory_space<vmem>>, vector<16x128xf32>
    tpu.vector_store %arg8[%c0_17, %c0_18], %21 {strides = array<i32>} : memref<16x128xf32, #tpu.memory_space<vmem>>, vector<16x128xf32>,
    return
  }
  func.func @transform_0(%arg0: i32) -> (i32, i32) {
    %c0_i32 = arith.constant 0 : i32
    %c0_i32_0 = arith.constant 0 : i32
    return %arg0, %c0_i32 : i32, i32
  }
  func.func @transform_1(%arg0: i32) -> (i32, i32) {
    %c0_i32 = arith.constant 0 : i32
    %c0_i32_0 = arith.constant 0 : i32
    %c0_i32_1 = arith.constant 0 : i32
    return %c0_i32, %c0_i32_0 : i32, i32
  }
  func.func @transform_2(%arg0: i32) -> (i32, i32) {
    %c0_i32 = arith.constant 0 : i32
    %c0_i32_0 = arith.constant 0 : i32
    %c0_i32_1 = arith.constant 0 : i32
    return %c0_i32, %c0_i32_0 : i32, i32
  }
  func.func @transform_3(%arg0: i32) -> (i32, i32) {
    %c0_i32 = arith.constant 0 : i32
    %c0_i32_0 = arith.constant 0 : i32
    %c0_i32_1 = arith.constant 0 : i32
    return %c0_i32, %c0_i32_0 : i32, i32
  }
  func.func @transform_4(%arg0: i32) -> (i32, i32) {
    %c0_i32 = arith.constant 0 : i32
    %c0_i32_0 = arith.constant 0 : i32
    %c0_i32_1 = arith.constant 0 : i32
    return %c0_i32, %c0_i32_0 : i32, i32
  }
  func.func @transform_5(%arg0: i32) -> (i32, i32) {
    %c0_i32 = arith.constant 0 : i32
    %c0_i32_0 = arith.constant 0 : i32
    %c0_i32_1 = arith.constant 0 : i32
    return %c0_i32, %c0_i32_0 : i32, i32
  }
  func.func @transform_6(%arg0: i32) -> (i32, i32) {
    %c0_i32 = arith.constant 0 : i32
    %c0_i32_0 = arith.constant 0 : i32
    %c0_i32_1 = arith.constant 0 : i32
    return %c0_i32, %c0_i32_0 : i32, i32
  }
  func.func @transform_7(%arg0: i32) -> (i32, i32) {
    %c0_i32 = arith.constant 0 : i32
    %c0_i32_0 = arith.constant 0 : i32
    return %arg0, %c0_i32 : i32, i32
  }
}

</mosaic_0001>

<llo_original>
// kernel: tpu_custom_call.1
$region0: #{tpu_custom_call.1}
  #allocation0 [shape = 'u32[]', space=smem, size = 0x4, offset = 0x4, fixed_abs, tag = 'smem constant byte address 0x4 - core index']
  #allocation1 [shape = 'u32[144,128]{1,0:T(1,128)}', space=vmem, size = 0x12000, scoped, tag = 'internal scratch']
  %s0 = inlined_call_operand.vmem [shape: bf16[16,8], index: 0, kind: input, shape index: {}]
  %s1 = inlined_call_operand.hbm [shape: bf16[8,1024], index: 1, kind: input, shape index: {}]
  %s2 = inlined_call_operand.vmem [shape: f32[1,1024], index: 2, kind: input, shape index: {}]
  %s3 = inlined_call_operand.hbm [shape: bf16[1024,512], index: 3, kind: input, shape index: {}]
  %s4 = inlined_call_operand.vmem [shape: f32[1,512], index: 4, kind: input, shape index: {}]
  %s5 = inlined_call_operand.hbm [shape: bf16[512,128], index: 5, kind: input, shape index: {}]
  %s6 = inlined_call_operand.vmem [shape: f32[1,128], index: 6, kind: input, shape index: {}]
  %s7 = inlined_call_operand.hbm [shape: f32[16,128], index: 7, kind: output, shape index: {}]
  %s8 = sld [smem:[#allocation0]]
  $region50: #{tpu_custom_call.1} parent=0
    _
  %s10 = ssub.s32 1, %s8
  %s11 = scalar_select 0, %s10, %s8
  $region1: #{tpu_custom_call.1} parent=0
    #allocation2 [shape = 'u8[16384]{0}', space=vmem, size = 0x4000, scoped, tag = 'input window, operand 1, single buffered']
    #allocation3 [shape = 's32[1]{0}', space=sflag, size = 0x4, scoped, tag = 'scoped memory for tpu_custom_call.1']
    #allocation4 [shape = 's32[1]{0}', space=sflag, size = 0x4, scoped, tag = 'scoped memory for tpu_custom_call.1']
    #allocation5 [shape = 'u8[1048576]{0}', space=vmem, size = 0x100000, scoped, tag = 'input window, operand 3, single buffered']
    #allocation6 [shape = 's32[1]{0}', space=sflag, size = 0x4, scoped, tag = 'scoped memory for tpu_custom_call.1']
    #allocation7 [shape = 'u8[131072]{0}', space=vmem, size = 0x20000, scoped, tag = 'input window, operand 5, single buffered']
    #allocation8 [shape = 'u8[8192]{0}', space=vmem, size = 0x2000, scoped, tag = 'output window, operand 0, single buffered']
    %12 = vsyncpa [#allocation3], 0
    %13 = vsyncpa [#allocation6], 0
    %14 = vsyncpa [#allocation4], 0
    // Predicated region
    $region2: #{tpu_custom_call.1} parent=1 // pred_check
      _
    $region3: #{tpu_custom_call.1} parent=1 // pred_check_branch
      %16 = sbr.rel (0) target = $region5
    $region4: #{tpu_custom_call.1} parent=1 // pred_region
      _
    $region5: #{tpu_custom_call.1} parent=1 // pred_fallthru
      _
    // Predicated region
    $region6: #{tpu_custom_call.1} parent=1 // pred_check
      _
    $region7: #{tpu_custom_call.1} parent=1 // pred_check_branch
      %18 = sbr.rel (0) target = $region9
    $region8: #{tpu_custom_call.1} parent=1 // pred_region
      %s20 = ssub.s32 512, 512
      %21 = vsyncadd [#allocation3], %s20
      %s23 = sshll.u32 [#allocation2], 4
      %s24 = int_to_ptr.vmem [resolvable:$true] %s23
      %26 = dma.hbm_to_vmem [thread:$0]  %s1, 512, %s24, [#allocation3]
    $region9: #{tpu_custom_call.1} parent=1 // pred_fallthru
      _
    // Predicated region
    $region10: #{tpu_custom_call.1} parent=1 // pred_check
      _
    $region11: #{tpu_custom_call.1} parent=1 // pred_check_branch
      %28 = sbr.rel (0) target = $region13
    $region12: #{tpu_custom_call.1} parent=1 // pred_region
      _
    $region13: #{tpu_custom_call.1} parent=1 // pred_fallthru
      _
    // Predicated region
    $region14: #{tpu_custom_call.1} parent=1 // pred_check
      _
    $region15: #{tpu_custom_call.1} parent=1 // pred_check_branch
      %30 = sbr.rel (0) target = $region17
    $region16: #{tpu_custom_call.1} parent=1 // pred_region
      %s32 = ssub.s32 32768, 32768
      %33 = vsyncadd [#allocation6], %s32
      %s34 = sshll.u32 [#allocation5], 4
      %s35 = int_to_ptr.vmem [resolvable:$true] %s34
      %40 = dma.hbm_to_vmem [thread:$0]  %s3, 32768, %s35, [#allocation6], 256, 256, 16
    $region17: #{tpu_custom_call.1} parent=1 // pred_fallthru
      _
    // Predicated region
    $region18: #{tpu_custom_call.1} parent=1 // pred_check
      _
    $region19: #{tpu_custom_call.1} parent=1 // pred_check_branch
      %42 = sbr.rel (0) target = $region21
    $region20: #{tpu_custom_call.1} parent=1 // pred_region
      _
    $region21: #{tpu_custom_call.1} parent=1 // pred_fallthru
      _
    // Predicated region
    $region22: #{tpu_custom_call.1} parent=1 // pred_check
      _
    $region23: #{tpu_custom_call.1} parent=1 // pred_check_branch
      %44 = sbr.rel (0) target = $region25
    $region24: #{tpu_custom_call.1} parent=1 // pred_region
      %s46 = ssub.s32 4096, 4096
      %47 = vsyncadd [#allocation6], %s46
      %s48 = sshll.u32 [#allocation7], 4
      %s49 = int_to_ptr.vmem [resolvable:$true] %s48
      %54 = dma.hbm_to_vmem [thread:$0]  %s5, 4096, %s49, [#allocation6], 64, 64, 4
    $region25: #{tpu_custom_call.1} parent=1 // pred_fallthru
      _
    // Predicated region
    $region26: #{tpu_custom_call.1} parent=1 // pred_check
      _
    $region27: #{tpu_custom_call.1} parent=1 // pred_check_branch
      %56 = sbr.rel (0) target = $region29
    $region28: #{tpu_custom_call.1} parent=1 // pred_region
      _
    $region29: #{tpu_custom_call.1} parent=1 // pred_fallthru
      _
    // Predicated region
    $region30: #{tpu_custom_call.1} parent=1 // pred_check
      _
    $region31: #{tpu_custom_call.1} parent=1 // pred_check_branch
      %58 = sbr.rel (0) target = $region33
    $region32: #{tpu_custom_call.1} parent=1 // pred_region
      %59 = dma.done [#allocation3], 512
    $region33: #{tpu_custom_call.1} parent=1 // pred_fallthru
      _
    // Predicated region
    $region34: #{tpu_custom_call.1} parent=1 // pred_check
      _
    $region35: #{tpu_custom_call.1} parent=1 // pred_check_branch
      %61 = sbr.rel (0) target = $region37
    $region36: #{tpu_custom_call.1} parent=1 // pred_region
      %62 = dma.done [#allocation6], 32768
    $region37: #{tpu_custom_call.1} parent=1 // pred_fallthru
      _
    // Predicated region
    $region38: #{tpu_custom_call.1} parent=1 // pred_check
      _
    $region39: #{tpu_custom_call.1} parent=1 // pred_check_branch
      %64 = sbr.rel (0) target = $region41
    $region40: #{tpu_custom_call.1} parent=1 // pred_region
      %65 = dma.done [#allocation6], 4096
    $region41: #{tpu_custom_call.1} parent=1 // pred_fallthru
      _
    %v67 = vld [vmem:[%s0] sm:$0xf]
    %v68 = vld [vmem:[%s0 + $0x4] sm:$0xf]
    %v69 = vld [vmem:[#allocation2] sm:$0xff]
    %v70 = vld [vmem:[#allocation2 + $0x8] sm:$0xff]
    %v71 = vld [vmem:[#allocation2 + $0x10] sm:$0xff]
    %v72 = vld [vmem:[#allocation2 + $0x18] sm:$0xff]
    %v73 = vld [vmem:[%s2] sm:$0xff]
    %v75 = vlaneseq
    %v76 = vshrl.u32 %v75, 7
    %v77 = vsub.s32 0, %v76
    %v78 = vrot.slane %v73, %v77
    %v79 = vlaneseq
    %v80 = vshrl.u32 %v79, 7
    %v81 = vsub.s32 1, %v80
    %v82 = vrot.slane %v73, %v81
    %v83 = vlaneseq
    %v84 = vshrl.u32 %v83, 7
    %v85 = vsub.s32 2, %v84
    %v86 = vrot.slane %v73, %v85
    %v87 = vlaneseq
    %v88 = vshrl.u32 %v87, 7
    %v89 = vsub.s32 3, %v88
    %v90 = vrot.slane %v73, %v89
    %v91 = vlaneseq
    %v92 = vshrl.u32 %v91, 7
    %v93 = vsub.s32 4, %v92
    %v94 = vrot.slane %v73, %v93
    %v95 = vlaneseq
    %v96 = vshrl.u32 %v95, 7
    %v97 = vsub.s32 5, %v96
    %v98 = vrot.slane %v73, %v97
    %v99 = vlaneseq
    %v100 = vshrl.u32 %v99, 7
    %v101 = vsub.s32 6, %v100
    %v102 = vrot.slane %v73, %v101
    %v103 = vlaneseq
    %v104 = vshrl.u32 %v103, 7
    %v105 = vsub.s32 7, %v104
    %v106 = vrot.slane %v73, %v105
    %v117 = vunpack.c.l.b16 %v67
    %v118 = vunpack.c.l.b16 %v68
    %v119 = vpack.c.b16 %v118, %v117
    %v124 = vunpack.c.l.b16 %v69
    %v125 = vunpack.c.h.b16 %v69
    %v126 = vunpack.c.l.b16 %v70
    %v127 = vunpack.c.h.b16 %v70
    %v128 = vunpack.c.l.b16 %v71
    %v129 = vunpack.c.h.b16 %v71
    %v130 = vunpack.c.l.b16 %v72
    %v131 = vunpack.c.h.b16 %v72
    %v132 = vpack.c.b16 %v124, %v124
    %v133 = vpack.c.b16 %v125, %v125
    %v134 = vpack.c.b16 %v126, %v126
    %v135 = vpack.c.b16 %v127, %v127
    %v136 = vpack.c.b16 %v128, %v128
    %v137 = vpack.c.b16 %v129, %v129
    %v138 = vpack.c.b16 %v130, %v130
    %v139 = vpack.c.b16 %v131, %v131
    %vm140 = vcmask 64512
    %v142 = vsel %vm140, %v119, 0
    %vm144 = vcmask 1043456
    %v146 = vsel %vm144, %v132, 0
    %v149 = vsel %vm144, %v133, 0
    %v152 = vsel %vm144, %v134, 0
    %v155 = vsel %vm144, %v135, 0
    %v158 = vsel %vm144, %v136, 0
    %v161 = vsel %vm144, %v137, 0
    %v164 = vsel %vm144, %v138, 0
    %v167 = vsel %vm144, %v139, 0
    %169 = vmatprep.subr.bf16.mxu0 %v149
    %170 = vmatpush1.bf16.msra.mxu0 %v146
    %171 = vmatprep.subr.bf16.mxu0 0
    %172 = vmatpush1.bf16.msra.mxu0 0
    %173 = vmatprep.subr.bf16.mxu0 0
    %174 = vmatpush1.bf16.msra.mxu0 0
    %175 = vmatprep.subr.bf16.mxu0 0
    %176 = vmatpush1.bf16.msra.mxu0 0
    %177 = vmatprep.subr.bf16.mxu0 0
    %178 = vmatpush1.bf16.msra.mxu0 0
    %179 = vmatprep.subr.bf16.mxu0 0
    %180 = vmatpush1.bf16.msra.mxu0 0
    %181 = vmatprep.subr.bf16.mxu0 0
    %182 = vmatpush1.bf16.msra.mxu0 0
    %183 = vmatprep.subr.bf16.mxu0 0
    %184 = vmatpush1.bf16.msra.mxu0 0
    %185 = vmatprep.subr.bf16.mxu0 0
    %186 = vmatpush1.bf16.msra.mxu0 0
    %187 = vmatprep.subr.bf16.mxu0 0
    %188 = vmatpush1.bf16.msra.mxu0 0
    %189 = vmatprep.subr.bf16.mxu0 0
    %190 = vmatpush1.bf16.msra.mxu0 0
    %191 = vmatprep.subr.bf16.mxu0 0
    %192 = vmatpush1.bf16.msra.mxu0 0
    %193 = vmatprep.subr.bf16.mxu0 0
    %194 = vmatpush1.bf16.msra.mxu0 0
    %195 = vmatprep.subr.bf16.mxu0 0
    %196 = vmatpush1.bf16.msra.mxu0 0
    %197 = vmatprep.subr.bf16.mxu0 0
    %198 = vmatpush1.bf16.msra.mxu0 0
    %199 = vmatprep.subr.bf16.mxu0 0
    %200 = vmatpush1.bf16.msra.mxu0 0
    %201 = vmatprep.mubr.bf16.mxu0 0
    %202 = vmatmul.mubr.bf16.gmra.mrb[0].mxu0 %v142
    %v203 = vpop.f32.mrb[0].mxu0
    %v204 = vadd.f32 %v78, %v203
    %v205 = vpop.f32.mrb[0].mxu0
    %v206 = vadd.f32 %v82, %v205
    %v207 = vpop.f32.mrb[0].mxu0
    %v208 = vadd.f32 %v78, %v207
    %v209 = vpop.f32.mrb[0].mxu0
    %v210 = vadd.f32 %v82, %v209
    %211 = vdwg.mxu0
    %212 = vmatprep.subr.bf16.mxu0 %v155
    %213 = vmatpush1.bf16.msra.mxu0 %v152
    %214 = vmatprep.subr.bf16.mxu0 0
    %215 = vmatpush1.bf16.msra.mxu0 0
    %216 = vmatprep.subr.bf16.mxu0 0
    %217 = vmatpush1.bf16.msra.mxu0 0
    %218 = vmatprep.subr.bf16.mxu0 0
    %219 = vmatpush1.bf16.msra.mxu0 0
    %220 = vmatprep.subr.bf16.mxu0 0
    %221 = vmatpush1.bf16.msra.mxu0 0
    %222 = vmatprep.subr.bf16.mxu0 0
    %223 = vmatpush1.bf16.msra.mxu0 0
    %224 = vmatprep.subr.bf16.mxu0 0
    %225 = vmatpush1.bf16.msra.mxu0 0
    %226 = vmatprep.subr.bf16.mxu0 0
    %227 = vmatpush1.bf16.msra.mxu0 0
    %228 = vmatprep.subr.bf16.mxu0 0
    %229 = vmatpush1.bf16.msra.mxu0 0
    %230 = vmatprep.subr.bf16.mxu0 0
    %231 = vmatpush1.bf16.msra.mxu0 0
    %232 = vmatprep.subr.bf16.mxu0 0
    %233 = vmatpush1.bf16.msra.mxu0 0
    %234 = vmatprep.subr.bf16.mxu0 0
    %235 = vmatpush1.bf16.msra.mxu0 0
    %236 = vmatprep.subr.bf16.mxu0 0
    %237 = vmatpush1.bf16.msra.mxu0 0
    %238 = vmatprep.subr.bf16.mxu0 0
    %239 = vmatpush1.bf16.msra.mxu0 0
    %240 = vmatprep.subr.bf16.mxu0 0
    %241 = vmatpush1.bf16.msra.mxu0 0
    %242 = vmatprep.subr.bf16.mxu0 0
    %243 = vmatpush1.bf16.msra.mxu0 0
    %244 = vmatprep.mubr.bf16.mxu0 0
    %245 = vmatmul.mubr.bf16.gmra.mrb[0].mxu0 %v142
    %v246 = vpop.f32.mrb[0].mxu0
    %v247 = vadd.f32 %v86, %v246
    %v248 = vpop.f32.mrb[0].mxu0
    %v249 = vadd.f32 %v90, %v248
    %v250 = vpop.f32.mrb[0].mxu0
    %v251 = vadd.f32 %v86, %v250
    %v252 = vpop.f32.mrb[0].mxu0
    %v253 = vadd.f32 %v90, %v252
    %254 = vdwg.mxu0
    %255 = vmatprep.subr.bf16.mxu0 %v161
    %256 = vmatpush1.bf16.msra.mxu0 %v158
    %257 = vmatprep.subr.bf16.mxu0 0
    %258 = vmatpush1.bf16.msra.mxu0 0
    %259 = vmatprep.subr.bf16.mxu0 0
    %260 = vmatpush1.bf16.msra.mxu0 0
    %261 = vmatprep.subr.bf16.mxu0 0
    %262 = vmatpush1.bf16.msra.mxu0 0
    %263 = vmatprep.subr.bf16.mxu0 0
    %264 = vmatpush1.bf16.msra.mxu0 0
    %265 = vmatprep.subr.bf16.mxu0 0
    %266 = vmatpush1.bf16.msra.mxu0 0
    %267 = vmatprep.subr.bf16.mxu0 0
    %268 = vmatpush1.bf16.msra.mxu0 0
    %269 = vmatprep.subr.bf16.mxu0 0
    %270 = vmatpush1.bf16.msra.mxu0 0
    %271 = vmatprep.subr.bf16.mxu0 0
    %272 = vmatpush1.bf16.msra.mxu0 0
    %273 = vmatprep.subr.bf16.mxu0 0
    %274 = vmatpush1.bf16.msra.mxu0 0
    %275 = vmatprep.subr.bf16.mxu0 0
    %276 = vmatpush1.bf16.msra.mxu0 0
    %277 = vmatprep.subr.bf16.mxu0 0
    %278 = vmatpush1.bf16.msra.mxu0 0
    %279 = vmatprep.subr.bf16.mxu0 0
    %280 = vmatpush1.bf16.msra.mxu0 0
    %281 = vmatprep.subr.bf16.mxu0 0
    %282 = vmatpush1.bf16.msra.mxu0 0
    %283 = vmatprep.subr.bf16.mxu0 0
    %284 = vmatpush1.bf16.msra.mxu0 0
    %285 = vmatprep.subr.bf16.mxu0 0
    %286 = vmatpush1.bf16.msra.mxu0 0
    %287 = vmatprep.mubr.bf16.mxu0 0
    %288 = vmatmul.mubr.bf16.gmra.mrb[0].mxu0 %v142
    %v289 = vpop.f32.mrb[0].mxu0
    %v290 = vadd.f32 %v94, %v289
    %v291 = vpop.f32.mrb[0].mxu0
    %v292 = vadd.f32 %v98, %v291
    %v293 = vpop.f32.mrb[0].mxu0
    %v294 = vadd.f32 %v94, %v293
    %v295 = vpop.f32.mrb[0].mxu0
    %v296 = vadd.f32 %v98, %v295
    %297 = vdwg.mxu0
    %298 = vmatprep.subr.bf16.mxu0 %v167
    %299 = vmatpush1.bf16.msra.mxu0 %v164
    %300 = vmatprep.subr.bf16.mxu0 0
    %301 = vmatpush1.bf16.msra.mxu0 0
    %302 = vmatprep.subr.bf16.mxu0 0
    %303 = vmatpush1.bf16.msra.mxu0 0
    %304 = vmatprep.subr.bf16.mxu0 0
    %305 = vmatpush1.bf16.msra.mxu0 0
    %306 = vmatprep.subr.bf16.mxu0 0
    %307 = vmatpush1.bf16.msra.mxu0 0
    %308 = vmatprep.subr.bf16.mxu0 0
    %309 = vmatpush1.bf16.msra.mxu0 0
    %310 = vmatprep.subr.bf16.mxu0 0
    %311 = vmatpush1.bf16.msra.mxu0 0
    %312 = vmatprep.subr.bf16.mxu0 0
    %313 = vmatpush1.bf16.msra.mxu0 0
    %314 = vmatprep.subr.bf16.mxu0 0
    %315 = vmatpush1.bf16.msra.mxu0 0
    %316 = vmatprep.subr.bf16.mxu0 0
    %317 = vmatpush1.bf16.msra.mxu0 0
    %318 = vmatprep.subr.bf16.mxu0 0
    %319 = vmatpush1.bf16.msra.mxu0 0
    %320 = vmatprep.subr.bf16.mxu0 0
    %321 = vmatpush1.bf16.msra.mxu0 0
    %322 = vmatprep.subr.bf16.mxu0 0
    %323 = vmatpush1.bf16.msra.mxu0 0
    %324 = vmatprep.subr.bf16.mxu0 0
    %325 = vmatpush1.bf16.msra.mxu0 0
    %326 = vmatprep.subr.bf16.mxu0 0
    %327 = vmatpush1.bf16.msra.mxu0 0
    %328 = vmatprep.subr.bf16.mxu0 0
    %329 = vmatpush1.bf16.msra.mxu0 0
    %330 = vmatprep.mubr.bf16.mxu0 0
    %331 = vmatmul.mubr.bf16.gmra.mrb[0].mxu0 %v142
    %v332 = vpop.f32.mrb[0].mxu0
    %v333 = vadd.f32 %v102, %v332
    %v334 = vpop.f32.mrb[0].mxu0
    %v335 = vadd.f32 %v106, %v334
    %v336 = vpop.f32.mrb[0].mxu0
    %v337 = vadd.f32 %v102, %v336
    %v338 = vpop.f32.mrb[0].mxu0
    %v339 = vadd.f32 %v106, %v338
    %340 = vdwg.mxu0
    %v341 = vpack.c.bf16 %v208, %v204
    %v342 = vpack.c.bf16 %v210, %v206
    %v343 = vpack.c.bf16 %v251, %v247
    %v344 = vpack.c.bf16 %v253, %v249
    %v345 = vpack.c.bf16 %v294, %v290
    %v346 = vpack.c.bf16 %v296, %v292
    %v347 = vpack.c.bf16 %v337, %v333
    %v348 = vpack.c.bf16 %v339, %v335
    %v349 = vmax.bf16 %v341, 0
    %v350 = vmax.bf16 %v342, 0
    %v351 = vmax.bf16 %v343, 0
    %v352 = vmax.bf16 %v344, 0
    %v353 = vmax.bf16 %v345, 0
    %v354 = vmax.bf16 %v346, 0
    %v355 = vmax.bf16 %v347, 0
    %v356 = vmax.bf16 %v348, 0
    %v357 = vld [vmem:[#allocation5] sm:$0xff]
    %v358 = vld [vmem:[#allocation5 + $0x8] sm:$0xff]
    %v359 = vld [vmem:[#allocation5 + $0x10] sm:$0xff]
    %v360 = vld [vmem:[#allocation5 + $0x18] sm:$0xff]
    %v361 = vld [vmem:[#allocation5 + $0x20] sm:$0xff]
    %v362 = vld [vmem:[#allocation5 + $0x28] sm:$0xff]
    %v363 = vld [vmem:[#allocation5 + $0x30] sm:$0xff]
    %v364 = vld [vmem:[#allocation5 + $0x38] sm:$0xff]
    %v365 = vld [vmem:[#allocation5 + $0x40] sm:$0xff]
    %v366 = vld [vmem:[#allocation5 + $0x48] sm:$0xff]
    %v367 = vld [vmem:[#allocation5 + $0x50] sm:$0xff]
    %v368 = vld [vmem:[#allocation5 + $0x58] sm:$0xff]
    %v369 = vld [vmem:[#allocation5 + $0x60] sm:$0xff]
    %v370 = vld [vmem:[#allocation5 + $0x68] sm:$0xff]
    %v371 = vld [vmem:[#allocation5 + $0x70] sm:$0xff]
    %v372 = vld [vmem:[#allocation5 + $0x78] sm:$0xff]
    %v373 = vld [vmem:[#allocation5 + $0x80] sm:$0xff]
    %v374 = vld [vmem:[#allocation5 + $0x88] sm:$0xff]
    %v375 = vld [vmem:[#allocation5 + $0x90] sm:$0xff]
    %v376 = vld [vmem:[#allocation5 + $0x98] sm:$0xff]
    %v377 = vld [vmem:[#allocation5 + $0xa0] sm:$0xff]
    %v378 = vld [vmem:[#allocation5 + $0xa8] sm:$0xff]
    %v379 = vld [vmem:[#allocation5 + $0xb0] sm:$0xff]
    %v380 = vld [vmem:[#allocation5 + $0xb8] sm:$0xff]
    %v381 = vld [vmem:[#allocation5 + $0xc0] sm:$0xff]
    %v382 = vld [vmem:[#allocation5 + $0xc8] sm:$0xff]
    %v383 = vld [vmem:[#allocation5 + $0xd0] sm:$0xff]
    %v384 = vld [vmem:[#allocation5 + $0xd8] sm:$0xff]
    %v385 = vld [vmem:[#allocation5 + $0xe0] sm:$0xff]
    %v386 = vld [vmem:[#allocation5 + $0xe8] sm:$0xff]
    %v387 = vld [vmem:[#allocation5 + $0xf0] sm:$0xff]
    %v388 = vld [vmem:[#allocation5 + $0xf8] sm:$0xff]
    %v389 = vld [vmem:[#allocation5 + $0x100] sm:$0xff]
    %v390 = vld [vmem:[#allocation5 + $0x108] sm:$0xff]
    %v391 = vld [vmem:[#allocation5 + $0x110] sm:$0xff]
    %v392 = vld [vmem:[#allocation5 + $0x118] sm:$0xff]
    %v393 = vld [vmem:[#allocation5 + $0x120] sm:$0xff]
    %v394 = vld [vmem:[#allocation5 + $0x128] sm:$0xff]
    %v395 = vld [vmem:[#allocation5 + $0x130] sm:$0xff]
    %v396 = vld [vmem:[#allocation5 + $0x138] sm:$0xff]
    %v397 = vld [vmem:[#allocation5 + $0x140] sm:$0xff]
    %v398 = vld [vmem:[#allocation5 + $0x148] sm:$0xff]
    %v399 = vld [vmem:[#allocation5 + $0x150] sm:$0xff]
    %v400 = vld [vmem:[#allocation5 + $0x158] sm:$0xff]
    %v401 = vld [vmem:[#allocation5 + $0x160] sm:$0xff]
    %v402 = vld [vmem:[#allocation5 + $0x168] sm:$0xff]
    %v403 = vld [vmem:[#allocation5 + $0x170] sm:$0xff]
    %v404 = vld [vmem:[#allocation5 + $0x178] sm:$0xff]
    %v405 = vld [vmem:[#allocation5 + $0x180] sm:$0xff]
    %v406 = vld [vmem:[#allocation5 + $0x188] sm:$0xff]
    %v407 = vld [vmem:[#allocation5 + $0x190] sm:$0xff]
    %v408 = vld [vmem:[#allocation5 + $0x198] sm:$0xff]
    %v409 = vld [vmem:[#allocation5 + $0x1a0] sm:$0xff]
    %v410 = vld [vmem:[#allocation5 + $0x1a8] sm:$0xff]
    %v411 = vld [vmem:[#allocation5 + $0x1b0] sm:$0xff]
    %v412 = vld [vmem:[#allocation5 + $0x1b8] sm:$0xff]
    %v413 = vld [vmem:[#allocation5 + $0x1c0] sm:$0xff]
    %v414 = vld [vmem:[#allocation5 + $0x1c8] sm:$0xff]
    %v415 = vld [vmem:[#allocation5 + $0x1d0] sm:$0xff]
    %v416 = vld [vmem:[#allocation5 + $0x1d8] sm:$0xff]
    %v417 = vld [vmem:[#allocation5 + $0x1e0] sm:$0xff]
    %v418 = vld [vmem:[#allocation5 + $0x1e8] sm:$0xff]
    %v419 = vld [vmem:[#allocation5 + $0x1f0] sm:$0xff]
    %v420 = vld [vmem:[#allocation5 + $0x1f8] sm:$0xff]
    %v421 = vld [vmem:[#allocation5 + $0x200] sm:$0xff]
    %v422 = vld [vmem:[#allocation5 + $0x208] sm:$0xff]
    %v423 = vld [vmem:[#allocation5 + $0x210] sm:$0xff]
    %v424 = vld [vmem:[#allocation5 + $0x218] sm:$0xff]
    %v425 = vld [vmem:[#allocation5 + $0x220] sm:$0xff]
    %v426 = vld [vmem:[#allocation5 + $0x228] sm:$0xff]
    %v427 = vld [vmem:[#allocation5 + $0x230] sm:$0xff]
    %v428 = vld [vmem:[#allocation5 + $0x238] sm:$0xff]
    %v429 = vld [vmem:[#allocation5 + $0x240] sm:$0xff]
    %v430 = vld [vmem:[#allocation5 + $0x248] sm:$0xff]
    %v431 = vld [vmem:[#allocation5 + $0x250] sm:$0xff]
    %v432 = vld [vmem:[#allocation5 + $0x258] sm:$0xff]
    %v433 = vld [vmem:[#allocation5 + $0x260] sm:$0xff]
    %v434 = vld [vmem:[#allocation5 + $0x268] sm:$0xff]
    %v435 = vld [vmem:[#allocation5 + $0x270] sm:$0xff]
    %v436 = vld [vmem:[#allocation5 + $0x278] sm:$0xff]
    %v437 = vld [vmem:[#allocation5 + $0x280] sm:$0xff]
    %v438 = vld [vmem:[#allocation5 + $0x288] sm:$0xff]
    %v439 = vld [vmem:[#allocation5 + $0x290] sm:$0xff]
    %v440 = vld [vmem:[#allocation5 + $0x298] sm:$0xff]
    %v441 = vld [vmem:[#allocation5 + $0x2a0] sm:$0xff]
    %v442 = vld [vmem:[#allocation5 + $0x2a8] sm:$0xff]
    %v443 = vld [vmem:[#allocation5 + $0x2b0] sm:$0xff]
    %v444 = vld [vmem:[#allocation5 + $0x2b8] sm:$0xff]
    %v445 = vld [vmem:[#allocation5 + $0x2c0] sm:$0xff]
    %v446 = vld [vmem:[#allocation5 + $0x2c8] sm:$0xff]
    %v447 = vld [vmem:[#allocation5 + $0x2d0] sm:$0xff]
    %v448 = vld [vmem:[#allocation5 + $0x2d8] sm:$0xff]
    %v449 = vld [vmem:[#allocation5 + $0x2e0] sm:$0xff]
    %v450 = vld [vmem:[#allocation5 + $0x2e8] sm:$0xff]
    %v451 = vld [vmem:[#allocation5 + $0x2f0] sm:$0xff]
    %v452 = vld [vmem:[#allocation5 + $0x2f8] sm:$0xff]
    %v453 = vld [vmem:[#allocation5 + $0x300] sm:$0xff]
    %v454 = vld [vmem:[#allocation5 + $0x308] sm:$0xff]
    %v455 = vld [vmem:[#allocation5 + $0x310] sm:$0xff]
    %v456 = vld [vmem:[#allocation5 + $0x318] sm:$0xff]
    %v457 = vld [vmem:[#allocation5 + $0x320] sm:$0xff]
    %v458 = vld [vmem:[#allocation5 + $0x328] sm:$0xff]
    %v459 = vld [vmem:[#allocation5 + $0x330] sm:$0xff]
    %v460 = vld [vmem:[#allocation5 + $0x338] sm:$0xff]
    %v461 = vld [vmem:[#allocation5 + $0x340] sm:$0xff]
    %v462 = vld [vmem:[#allocation5 + $0x348] sm:$0xff]
    %v463 = vld [vmem:[#allocation5 + $0x350] sm:$0xff]
    %v464 = vld [vmem:[#allocation5 + $0x358] sm:$0xff]
    %v465 = vld [vmem:[#allocation5 + $0x360] sm:$0xff]
    %v466 = vld [vmem:[#allocation5 + $0x368] sm:$0xff]
    %v467 = vld [vmem:[#allocation5 + $0x370] sm:$0xff]
    %v468 = vld [vmem:[#allocation5 + $0x378] sm:$0xff]
    %v469 = vld [vmem:[#allocation5 + $0x380] sm:$0xff]
    %v470 = vld [vmem:[#allocation5 + $0x388] sm:$0xff]
    %v471 = vld [vmem:[#allocation5 + $0x390] sm:$0xff]
    %v472 = vld [vmem:[#allocation5 + $0x398] sm:$0xff]
    %v473 = vld [vmem:[#allocation5 + $0x3a0] sm:$0xff]
    %v474 = vld [vmem:[#allocation5 + $0x3a8] sm:$0xff]
    %v475 = vld [vmem:[#allocation5 + $0x3b0] sm:$0xff]
    %v476 = vld [vmem:[#allocation5 + $0x3b8] sm:$0xff]
    %v477 = vld [vmem:[#allocation5 + $0x3c0] sm:$0xff]
    %v478 = vld [vmem:[#allocation5 + $0x3c8] sm:$0xff]
    %v479 = vld [vmem:[#allocation5 + $0x3d0] sm:$0xff]
    %v480 = vld [vmem:[#allocation5 + $0x3d8] sm:$0xff]
    %v481 = vld [vmem:[#allocation5 + $0x3e0] sm:$0xff]
    %v482 = vld [vmem:[#allocation5 + $0x3e8] sm:$0xff]
    %v483 = vld [vmem:[#allocation5 + $0x3f0] sm:$0xff]
    %v484 = vld [vmem:[#allocation5 + $0x3f8] sm:$0xff]
    %v485 = vld [vmem:[#allocation5 + $0x400] sm:$0xff]
    %v486 = vld [vmem:[#allocation5 + $0x408] sm:$0xff]
    %v487 = vld [vmem:[#allocation5 + $0x410] sm:$0xff]
    %v488 = vld [vmem:[#allocation5 + $0x418] sm:$0xff]
    %v489 = vld [vmem:[#allocation5 + $0x420] sm:$0xff]
    %v490 = vld [vmem:[#allocation5 + $0x428] sm:$0xff]
    %v491 = vld [vmem:[#allocation5 + $0x430] sm:$0xff]
    %v492 = vld [vmem:[#allocation5 + $0x438] sm:$0xff]
    %v493 = vld [vmem:[#allocation5 + $0x440] sm:$0xff]
    %v494 = vld [vmem:[#allocation5 + $0x448] sm:$0xff]
    %v495 = vld [vmem:[#allocation5 + $0x450] sm:$0xff]
    %v496 = vld [vmem:[#allocation5 + $0x458] sm:$0xff]
    %v497 = vld [vmem:[#allocation5 + $0x460] sm:$0xff]
    %v498 = vld [vmem:[#allocation5 + $0x468] sm:$0xff]
    %v499 = vld [vmem:[#allocation5 + $0x470] sm:$0xff]
    %v500 = vld [vmem:[#allocation5 + $0x478] sm:$0xff]
    %v501 = vld [vmem:[#allocation5 + $0x480] sm:$0xff]
    %v502 = vld [vmem:[#allocation5 + $0x488] sm:$0xff]
    %v503 = vld [vmem:[#allocation5 + $0x490] sm:$0xff]
    %v504 = vld [vmem:[#allocation5 + $0x498] sm:$0xff]
    %v505 = vld [vmem:[#allocation5 + $0x4a0] sm:$0xff]
    %v506 = vld [vmem:[#allocation5 + $0x4a8] sm:$0xff]
    %v507 = vld [vmem:[#allocation5 + $0x4b0] sm:$0xff]
    %v508 = vld [vmem:[#allocation5 + $0x4b8] sm:$0xff]
    %v509 = vld [vmem:[#allocation5 + $0x4c0] sm:$0xff]
    %v510 = vld [vmem:[#allocation5 + $0x4c8] sm:$0xff]
    %v511 = vld [vmem:[#allocation5 + $0x4d0] sm:$0xff]
    %v512 = vld [vmem:[#allocation5 + $0x4d8] sm:$0xff]
    %v513 = vld [vmem:[#allocation5 + $0x4e0] sm:$0xff]
    %v514 = vld [vmem:[#allocation5 + $0x4e8] sm:$0xff]
    %v515 = vld [vmem:[#allocation5 + $0x4f0] sm:$0xff]
    %v516 = vld [vmem:[#allocation5 + $0x4f8] sm:$0xff]
    %v517 = vld [vmem:[#allocation5 + $0x500] sm:$0xff]
    %v518 = vld [vmem:[#allocation5 + $0x508] sm:$0xff]
    %v519 = vld [vmem:[#allocation5 + $0x510] sm:$0xff]
    %v520 = vld [vmem:[#allocation5 + $0x518] sm:$0xff]
    %v521 = vld [vmem:[#allocation5 + $0x520] sm:$0xff]
    %v522 = vld [vmem:[#allocation5 + $0x528] sm:$0xff]
    %v523 = vld [vmem:[#allocation5 + $0x530] sm:$0xff]
    %v524 = vld [vmem:[#allocation5 + $0x538] sm:$0xff]
    %v525 = vld [vmem:[#allocation5 + $0x540] sm:$0xff]
    %v526 = vld [vmem:[#allocation5 + $0x548] sm:$0xff]
    %v527 = vld [vmem:[#allocation5 + $0x550] sm:$0xff]
    %v528 = vld [vmem:[#allocation5 + $0x558] sm:$0xff]
    %v529 = vld [vmem:[#allocation5 + $0x560] sm:$0xff]
    %v530 = vld [vmem:[#allocation5 + $0x568] sm:$0xff]
    %v531 = vld [vmem:[#allocation5 + $0x570] sm:$0xff]
    %v532 = vld [vmem:[#allocation5 + $0x578] sm:$0xff]
    %v533 = vld [vmem:[#allocation5 + $0x580] sm:$0xff]
    %v534 = vld [vmem:[#allocation5 + $0x588] sm:$0xff]
    %v535 = vld [vmem:[#allocation5 + $0x590] sm:$0xff]
    %v536 = vld [vmem:[#allocation5 + $0x598] sm:$0xff]
    %v537 = vld [vmem:[#allocation5 + $0x5a0] sm:$0xff]
    %v538 = vld [vmem:[#allocation5 + $0x5a8] sm:$0xff]
    %v539 = vld [vmem:[#allocation5 + $0x5b0] sm:$0xff]
    %v540 = vld [vmem:[#allocation5 + $0x5b8] sm:$0xff]
    %v541 = vld [vmem:[#allocation5 + $0x5c0] sm:$0xff]
    %v542 = vld [vmem:[#allocation5 + $0x5c8] sm:$0xff]
    %v543 = vld [vmem:[#allocation5 + $0x5d0] sm:$0xff]
    %v544 = vld [vmem:[#allocation5 + $0x5d8] sm:$0xff]
    %v545 = vld [vmem:[#allocation5 + $0x5e0] sm:$0xff]
    %v546 = vld [vmem:[#allocation5 + $0x5e8] sm:$0xff]
    %v547 = vld [vmem:[#allocation5 + $0x5f0] sm:$0xff]
    %v548 = vld [vmem:[#allocation5 + $0x5f8] sm:$0xff]
    %v549 = vld [vmem:[#allocation5 + $0x600] sm:$0xff]
    %v550 = vld [vmem:[#allocation5 + $0x608] sm:$0xff]
    %v551 = vld [vmem:[#allocation5 + $0x610] sm:$0xff]
    %v552 = vld [vmem:[#allocation5 + $0x618] sm:$0xff]
    %v553 = vld [vmem:[#allocation5 + $0x620] sm:$0xff]
    %v554 = vld [vmem:[#allocation5 + $0x628] sm:$0xff]
    %v555 = vld [vmem:[#allocation5 + $0x630] sm:$0xff]
    %v556 = vld [vmem:[#allocation5 + $0x638] sm:$0xff]
    %v557 = vld [vmem:[#allocation5 + $0x640] sm:$0xff]
    %v558 = vld [vmem:[#allocation5 + $0x648] sm:$0xff]
    %v559 = vld [vmem:[#allocation5 + $0x650] sm:$0xff]
    %v560 = vld [vmem:[#allocation5 + $0x658] sm:$0xff]
    %v561 = vld [vmem:[#allocation5 + $0x660] sm:$0xff]
    %v562 = vld [vmem:[#allocation5 + $0x668] sm:$0xff]
    %v563 = vld [vmem:[#allocation5 + $0x670] sm:$0xff]
    %v564 = vld [vmem:[#allocation5 + $0x678] sm:$0xff]
    %v565 = vld [vmem:[#allocation5 + $0x680] sm:$0xff]
    %v566 = vld [vmem:[#allocation5 + $0x688] sm:$0xff]
    %v567 = vld [vmem:[#allocation5 + $0x690] sm:$0xff]
    %v568 = vld [vmem:[#allocation5 + $0x698] sm:$0xff]
    %v569 = vld [vmem:[#allocation5 + $0x6a0] sm:$0xff]
    %v570 = vld [vmem:[#allocation5 + $0x6a8] sm:$0xff]
    %v571 = vld [vmem:[#allocation5 + $0x6b0] sm:$0xff]
    %v572 = vld [vmem:[#allocation5 + $0x6b8] sm:$0xff]
    %v573 = vld [vmem:[#allocation5 + $0x6c0] sm:$0xff]
    %v574 = vld [vmem:[#allocation5 + $0x6c8] sm:$0xff]
    %v575 = vld [vmem:[#allocation5 + $0x6d0] sm:$0xff]
    %v576 = vld [vmem:[#allocation5 + $0x6d8] sm:$0xff]
    %v577 = vld [vmem:[#allocation5 + $0x6e0] sm:$0xff]
    %v578 = vld [vmem:[#allocation5 + $0x6e8] sm:$0xff]
    %v579 = vld [vmem:[#allocation5 + $0x6f0] sm:$0xff]
    %v580 = vld [vmem:[#allocation5 + $0x6f8] sm:$0xff]
    %v581 = vld [vmem:[#allocation5 + $0x700] sm:$0xff]
    %v582 = vld [vmem:[#allocation5 + $0x708] sm:$0xff]
    %v583 = vld [vmem:[#allocation5 + $0x710] sm:$0xff]
    %v584 = vld [vmem:[#allocation5 + $0x718] sm:$0xff]
    %v585 = vld [vmem:[#allocation5 + $0x720] sm:$0xff]
    %v586 = vld [vmem:[#allocation5 + $0x728] sm:$0xff]
    %v587 = vld [vmem:[#allocation5 + $0x730] sm:$0xff]
    %v588 = vld [vmem:[#allocation5 + $0x738] sm:$0xff]
    %v589 = vld [vmem:[#allocation5 + $0x740] sm:$0xff]
    %v590 = vld [vmem:[#allocation5 + $0x748] sm:$0xff]
    %v591 = vld [vmem:[#allocation5 + $0x750] sm:$0xff]
    %v592 = vld [vmem:[#allocation5 + $0x758] sm:$0xff]
    %v593 = vld [vmem:[#allocation5 + $0x760] sm:$0xff]
    %v594 = vld [vmem:[#allocation5 + $0x768] sm:$0xff]
    %v595 = vld [vmem:[#allocation5 + $0x770] sm:$0xff]
    %v596 = vld [vmem:[#allocation5 + $0x778] sm:$0xff]
    %v597 = vld [vmem:[#allocation5 + $0x780] sm:$0xff]
    %v598 = vld [vmem:[#allocation5 + $0x788] sm:$0xff]
    %v599 = vld [vmem:[#allocation5 + $0x790] sm:$0xff]
    %v600 = vld [vmem:[#allocation5 + $0x798] sm:$0xff]
    %v601 = vld [vmem:[#allocation5 + $0x7a0] sm:$0xff]
    %v602 = vld [vmem:[#allocation5 + $0x7a8] sm:$0xff]
    %v603 = vld [vmem:[#allocation5 + $0x7b0] sm:$0xff]
    %v604 = vld [vmem:[#allocation5 + $0x7b8] sm:$0xff]
    %v605 = vld [vmem:[#allocation5 + $0x7c0] sm:$0xff]
    %v606 = vld [vmem:[#allocation5 + $0x7c8] sm:$0xff]
    %v607 = vld [vmem:[#allocation5 + $0x7d0] sm:$0xff]
    %v608 = vld [vmem:[#allocation5 + $0x7d8] sm:$0xff]
    %v609 = vld [vmem:[#allocation5 + $0x7e0] sm:$0xff]
    %v610 = vld [vmem:[#allocation5 + $0x7e8] sm:$0xff]
    %v611 = vld [vmem:[#allocation5 + $0x7f0] sm:$0xff]
    %v612 = vld [vmem:[#allocation5 + $0x7f8] sm:$0xff]
    %v613 = vld [vmem:[%s4] sm:$0xf]
    %v615 = vlaneseq
    %v616 = vshrl.u32 %v615, 7
    %v617 = vsub.s32 0, %v616
    %v618 = vrot.slane %v613, %v617
    %v619 = vlaneseq
    %v620 = vshrl.u32 %v619, 7
    %v621 = vsub.s32 1, %v620
    %v622 = vrot.slane %v613, %v621
    %v623 = vlaneseq
    %v624 = vshrl.u32 %v623, 7
    %v625 = vsub.s32 2, %v624
    %v626 = vrot.slane %v613, %v625
    %v627 = vlaneseq
    %v628 = vshrl.u32 %v627, 7
    %v629 = vsub.s32 3, %v628
    %v630 = vrot.slane %v613, %v629
    %v891 = vunpack.c.l.b16 %v357
    %v892 = vunpack.c.h.b16 %v357
    %v893 = vunpack.c.l.b16 %v358
    %v894 = vunpack.c.h.b16 %v358
    %v895 = vunpack.c.l.b16 %v359
    %v896 = vunpack.c.h.b16 %v359
    %v897 = vunpack.c.l.b16 %v360
    %v898 = vunpack.c.h.b16 %v360
    %v899 = vunpack.c.l.b16 %v361
    %v900 = vunpack.c.h.b16 %v361
    %v901 = vunpack.c.l.b16 %v362
    %v902 = vunpack.c.h.b16 %v362
    %v903 = vunpack.c.l.b16 %v363
    %v904 = vunpack.c.h.b16 %v363
    %v905 = vunpack.c.l.b16 %v364
    %v906 = vunpack.c.h.b16 %v364
    %v907 = vunpack.c.l.b16 %v365
    %v908 = vunpack.c.h.b16 %v365
    %v909 = vunpack.c.l.b16 %v366
    %v910 = vunpack.c.h.b16 %v366
    %v911 = vunpack.c.l.b16 %v367
    %v912 = vunpack.c.h.b16 %v367
    %v913 = vunpack.c.l.b16 %v368
    %v914 = vunpack.c.h.b16 %v368
    %v915 = vunpack.c.l.b16 %v369
    %v916 = vunpack.c.h.b16 %v369
    %v917 = vunpack.c.l.b16 %v370
    %v918 = vunpack.c.h.b16 %v370
    %v919 = vunpack.c.l.b16 %v371
    %v920 = vunpack.c.h.b16 %v371
    %v921 = vunpack.c.l.b16 %v372
    %v922 = vunpack.c.h.b16 %v372
    %v923 = vunpack.c.l.b16 %v373
    %v924 = vunpack.c.h.b16 %v373
    %v925 = vunpack.c.l.b16 %v374
    %v926 = vunpack.c.h.b16 %v374
    %v927 = vunpack.c.l.b16 %v375
    %v928 = vunpack.c.h.b16 %v375
    %v929 = vunpack.c.l.b16 %v376
    %v930 = vunpack.c.h.b16 %v376
    %v931 = vunpack.c.l.b16 %v377
    %v932 = vunpack.c.h.b16 %v377
    %v933 = vunpack.c.l.b16 %v378
    %v934 = vunpack.c.h.b16 %v378
    %v935 = vunpack.c.l.b16 %v379
    %v936 = vunpack.c.h.b16 %v379
    %v937 = vunpack.c.l.b16 %v380
    %v938 = vunpack.c.h.b16 %v380
    %v939 = vunpack.c.l.b16 %v381
    %v940 = vunpack.c.h.b16 %v381
    %v941 = vunpack.c.l.b16 %v382
    %v942 = vunpack.c.h.b16 %v382
    %v943 = vunpack.c.l.b16 %v383
    %v944 = vunpack.c.h.b16 %v383
    %v945 = vunpack.c.l.b16 %v384
    %v946 = vunpack.c.h.b16 %v384
    %v947 = vunpack.c.l.b16 %v385
    %v948 = vunpack.c.h.b16 %v385
    %v949 = vunpack.c.l.b16 %v386
    %v950 = vunpack.c.h.b16 %v386
    %v951 = vunpack.c.l.b16 %v387
    %v952 = vunpack.c.h.b16 %v387
    %v953 = vunpack.c.l.b16 %v388
    %v954 = vunpack.c.h.b16 %v388
    %v955 = vunpack.c.l.b16 %v389
    %v956 = vunpack.c.h.b16 %v389
    %v957 = vunpack.c.l.b16 %v390
    %v958 = vunpack.c.h.b16 %v390
    %v959 = vunpack.c.l.b16 %v391
    %v960 = vunpack.c.h.b16 %v391
    %v961 = vunpack.c.l.b16 %v392
    %v962 = vunpack.c.h.b16 %v392
    %v963 = vunpack.c.l.b16 %v393
    %v964 = vunpack.c.h.b16 %v393
    %v965 = vunpack.c.l.b16 %v394
    %v966 = vunpack.c.h.b16 %v394
    %v967 = vunpack.c.l.b16 %v395
    %v968 = vunpack.c.h.b16 %v395
    %v969 = vunpack.c.l.b16 %v396
    %v970 = vunpack.c.h.b16 %v396
    %v971 = vunpack.c.l.b16 %v397
    %v972 = vunpack.c.h.b16 %v397
    %v973 = vunpack.c.l.b16 %v398
    %v974 = vunpack.c.h.b16 %v398
    %v975 = vunpack.c.l.b16 %v399
    %v976 = vunpack.c.h.b16 %v399
    %v977 = vunpack.c.l.b16 %v400
    %v978 = vunpack.c.h.b16 %v400
    %v979 = vunpack.c.l.b16 %v401
    %v980 = vunpack.c.h.b16 %v401
    %v981 = vunpack.c.l.b16 %v402
    %v982 = vunpack.c.h.b16 %v402
    %v983 = vunpack.c.l.b16 %v403
    %v984 = vunpack.c.h.b16 %v403
    %v985 = vunpack.c.l.b16 %v404
    %v986 = vunpack.c.h.b16 %v404
    %v987 = vunpack.c.l.b16 %v405
    %v988 = vunpack.c.h.b16 %v405
    %v989 = vunpack.c.l.b16 %v406
    %v990 = vunpack.c.h.b16 %v406
    %v991 = vunpack.c.l.b16 %v407
    %v992 = vunpack.c.h.b16 %v407
    %v993 = vunpack.c.l.b16 %v408
    %v994 = vunpack.c.h.b16 %v408
    %v995 = vunpack.c.l.b16 %v409
    %v996 = vunpack.c.h.b16 %v409
    %v997 = vunpack.c.l.b16 %v410
    %v998 = vunpack.c.h.b16 %v410
    %v999 = vunpack.c.l.b16 %v411
    %v1000 = vunpack.c.h.b16 %v411
    %v1001 = vunpack.c.l.b16 %v412
    %v1002 = vunpack.c.h.b16 %v412
    %v1003 = vunpack.c.l.b16 %v413
    %v1004 = vunpack.c.h.b16 %v413
    %v1005 = vunpack.c.l.b16 %v414
    %v1006 = vunpack.c.h.b16 %v414
    %v1007 = vunpack.c.l.b16 %v415
    %v1008 = vunpack.c.h.b16 %v415
    %v1009 = vunpack.c.l.b16 %v416
    %v1010 = vunpack.c.h.b16 %v416
    %v1011 = vunpack.c.l.b16 %v417
    %v1012 = vunpack.c.h.b16 %v417
    %v1013 = vunpack.c.l.b16 %v418
    %v1014 = vunpack.c.h.b16 %v418
    %v1015 = vunpack.c.l.b16 %v419
    %v1016 = vunpack.c.h.b16 %v419
    %v1017 = vunpack.c.l.b16 %v420
    %v1018 = vunpack.c.h.b16 %v420
    %v1019 = vunpack.c.l.b16 %v421
    %v1020 = vunpack.c.h.b16 %v421
    %v1021 = vunpack.c.l.b16 %v422
    %v1022 = vunpack.c.h.b16 %v422
    %v1023 = vunpack.c.l.b16 %v423
    %v1024 = vunpack.c.h.b16 %v423
    %v1025 = vunpack.c.l.b16 %v424
    %v1026 = vunpack.c.h.b16 %v424
    %v1027 = vunpack.c.l.b16 %v425
    %v1028 = vunpack.c.h.b16 %v425
    %v1029 = vunpack.c.l.b16 %v426
    %v1030 = vunpack.c.h.b16 %v426
    %v1031 = vunpack.c.l.b16 %v427
    %v1032 = vunpack.c.h.b16 %v427
    %v1033 = vunpack.c.l.b16 %v428
    %v1034 = vunpack.c.h.b16 %v428
    %v1035 = vunpack.c.l.b16 %v429
    %v1036 = vunpack.c.h.b16 %v429
    %v1037 = vunpack.c.l.b16 %v430
    %v1038 = vunpack.c.h.b16 %v430
    %v1039 = vunpack.c.l.b16 %v431
    %v1040 = vunpack.c.h.b16 %v431
    %v1041 = vunpack.c.l.b16 %v432
    %v1042 = vunpack.c.h.b16 %v432
    %v1043 = vunpack.c.l.b16 %v433
    %v1044 = vunpack.c.h.b16 %v433
    %v1045 = vunpack.c.l.b16 %v434
    %v1046 = vunpack.c.h.b16 %v434
    %v1047 = vunpack.c.l.b16 %v435
    %v1048 = vunpack.c.h.b16 %v435
    %v1049 = vunpack.c.l.b16 %v436
    %v1050 = vunpack.c.h.b16 %v436
    %v1051 = vunpack.c.l.b16 %v437
    %v1052 = vunpack.c.h.b16 %v437
    %v1053 = vunpack.c.l.b16 %v438
    %v1054 = vunpack.c.h.b16 %v438
    %v1055 = vunpack.c.l.b16 %v439
    %v1056 = vunpack.c.h.b16 %v439
    %v1057 = vunpack.c.l.b16 %v440
    %v1058 = vunpack.c.h.b16 %v440
    %v1059 = vunpack.c.l.b16 %v441
    %v1060 = vunpack.c.h.b16 %v441
    %v1061 = vunpack.c.l.b16 %v442
    %v1062 = vunpack.c.h.b16 %v442
    %v1063 = vunpack.c.l.b16 %v443
    %v1064 = vunpack.c.h.b16 %v443
    %v1065 = vunpack.c.l.b16 %v444
    %v1066 = vunpack.c.h.b16 %v444
    %v1067 = vunpack.c.l.b16 %v445
    %v1068 = vunpack.c.h.b16 %v445
    %v1069 = vunpack.c.l.b16 %v446
    %v1070 = vunpack.c.h.b16 %v446
    %v1071 = vunpack.c.l.b16 %v447
    %v1072 = vunpack.c.h.b16 %v447
    %v1073 = vunpack.c.l.b16 %v448
    %v1074 = vunpack.c.h.b16 %v448
    %v1075 = vunpack.c.l.b16 %v449
    %v1076 = vunpack.c.h.b16 %v449
    %v1077 = vunpack.c.l.b16 %v450
    %v1078 = vunpack.c.h.b16 %v450
    %v1079 = vunpack.c.l.b16 %v451
    %v1080 = vunpack.c.h.b16 %v451
    %v1081 = vunpack.c.l.b16 %v452
    %v1082 = vunpack.c.h.b16 %v452
    %v1083 = vunpack.c.l.b16 %v453
    %v1084 = vunpack.c.h.b16 %v453
    %v1085 = vunpack.c.l.b16 %v454
    %v1086 = vunpack.c.h.b16 %v454
    %v1087 = vunpack.c.l.b16 %v455
    %v1088 = vunpack.c.h.b16 %v455
    %v1089 = vunpack.c.l.b16 %v456
    %v1090 = vunpack.c.h.b16 %v456
    %v1091 = vunpack.c.l.b16 %v457
    %v1092 = vunpack.c.h.b16 %v457
    %v1093 = vunpack.c.l.b16 %v458
    %v1094 = vunpack.c.h.b16 %v458
    %v1095 = vunpack.c.l.b16 %v459
    %v1096 = vunpack.c.h.b16 %v459
    %v1097 = vunpack.c.l.b16 %v460
    %v1098 = vunpack.c.h.b16 %v460
    %v1099 = vunpack.c.l.b16 %v461
    %v1100 = vunpack.c.h.b16 %v461
    %v1101 = vunpack.c.l.b16 %v462
    %v1102 = vunpack.c.h.b16 %v462
    %v1103 = vunpack.c.l.b16 %v463
    %v1104 = vunpack.c.h.b16 %v463
    %v1105 = vunpack.c.l.b16 %v464
    %v1106 = vunpack.c.h.b16 %v464
    %v1107 = vunpack.c.l.b16 %v465
    %v1108 = vunpack.c.h.b16 %v465
    %v1109 = vunpack.c.l.b16 %v466
    %v1110 = vunpack.c.h.b16 %v466
    %v1111 = vunpack.c.l.b16 %v467
    %v1112 = vunpack.c.h.b16 %v467
    %v1113 = vunpack.c.l.b16 %v468
    %v1114 = vunpack.c.h.b16 %v468
    %v1115 = vunpack.c.l.b16 %v469
    %v1116 = vunpack.c.h.b16 %v469
    %v1117 = vunpack.c.l.b16 %v470
    %v1118 = vunpack.c.h.b16 %v470
    %v1119 = vunpack.c.l.b16 %v471
    %v1120 = vunpack.c.h.b16 %v471
    %v1121 = vunpack.c.l.b16 %v472
    %v1122 = vunpack.c.h.b16 %v472
    %v1123 = vunpack.c.l.b16 %v473
    %v1124 = vunpack.c.h.b16 %v473
    %v1125 = vunpack.c.l.b16 %v474
    %v1126 = vunpack.c.h.b16 %v474
    %v1127 = vunpack.c.l.b16 %v475
    %v1128 = vunpack.c.h.b16 %v475
    %v1129 = vunpack.c.l.b16 %v476
    %v1130 = vunpack.c.h.b16 %v476
    %v1131 = vunpack.c.l.b16 %v477
    %v1132 = vunpack.c.h.b16 %v477
    %v1133 = vunpack.c.l.b16 %v478
    %v1134 = vunpack.c.h.b16 %v478
    %v1135 = vunpack.c.l.b16 %v479
    %v1136 = vunpack.c.h.b16 %v479
    %v1137 = vunpack.c.l.b16 %v480
    %v1138 = vunpack.c.h.b16 %v480
    %v1139 = vunpack.c.l.b16 %v481
    %v1140 = vunpack.c.h.b16 %v481
    %v1141 = vunpack.c.l.b16 %v482
    %v1142 = vunpack.c.h.b16 %v482
    %v1143 = vunpack.c.l.b16 %v483
    %v1144 = vunpack.c.h.b16 %v483
    %v1145 = vunpack.c.l.b16 %v484
    %v1146 = vunpack.c.h.b16 %v484
    %v1147 = vunpack.c.l.b16 %v485
    %v1148 = vunpack.c.h.b16 %v485
    %v1149 = vunpack.c.l.b16 %v486
    %v1150 = vunpack.c.h.b16 %v486
    %v1151 = vunpack.c.l.b16 %v487
    %v1152 = vunpack.c.h.b16 %v487
    %v1153 = vunpack.c.l.b16 %v488
    %v1154 = vunpack.c.h.b16 %v488
    %v1155 = vunpack.c.l.b16 %v489
    %v1156 = vunpack.c.h.b16 %v489
    %v1157 = vunpack.c.l.b16 %v490
    %v1158 = vunpack.c.h.b16 %v490
    %v1159 = vunpack.c.l.b16 %v491
    %v1160 = vunpack.c.h.b16 %v491
    %v1161 = vunpack.c.l.b16 %v492
    %v1162 = vunpack.c.h.b16 %v492
    %v1163 = vunpack.c.l.b16 %v493
    %v1164 = vunpack.c.h.b16 %v493
    %v1165 = vunpack.c.l.b16 %v494
    %v1166 = vunpack.c.h.b16 %v494
    %v1167 = vunpack.c.l.b16 %v495
    %v1168 = vunpack.c.h.b16 %v495
    %v1169 = vunpack.c.l.b16 %v496
    %v1170 = vunpack.c.h.b16 %v496
    %v1171 = vunpack.c.l.b16 %v497
    %v1172 = vunpack.c.h.b16 %v497
    %v1173 = vunpack.c.l.b16 %v498
    %v1174 = vunpack.c.h.b16 %v498
    %v1175 = vunpack.c.l.b16 %v499
    %v1176 = vunpack.c.h.b16 %v499
    %v1177 = vunpack.c.l.b16 %v500
    %v1178 = vunpack.c.h.b16 %v500
    %v1179 = vunpack.c.l.b16 %v501
    %v1180 = vunpack.c.h.b16 %v501
    %v1181 = vunpack.c.l.b16 %v502
    %v1182 = vunpack.c.h.b16 %v502
    %v1183 = vunpack.c.l.b16 %v503
    %v1184 = vunpack.c.h.b16 %v503
    %v1185 = vunpack.c.l.b16 %v504
    %v1186 = vunpack.c.h.b16 %v504
    %v1187 = vunpack.c.l.b16 %v505
    %v1188 = vunpack.c.h.b16 %v505
    %v1189 = vunpack.c.l.b16 %v506
    %v1190 = vunpack.c.h.b16 %v506
    %v1191 = vunpack.c.l.b16 %v507
    %v1192 = vunpack.c.h.b16 %v507
    %v1193 = vunpack.c.l.b16 %v508
    %v1194 = vunpack.c.h.b16 %v508
    %v1195 = vunpack.c.l.b16 %v509
    %v1196 = vunpack.c.h.b16 %v509
    %v1197 = vunpack.c.l.b16 %v510
    %v1198 = vunpack.c.h.b16 %v510
    %v1199 = vunpack.c.l.b16 %v511
    %v1200 = vunpack.c.h.b16 %v511
    %v1201 = vunpack.c.l.b16 %v512
    %v1202 = vunpack.c.h.b16 %v512
    %v1203 = vunpack.c.l.b16 %v513
    %v1204 = vunpack.c.h.b16 %v513
    %v1205 = vunpack.c.l.b16 %v514
    %v1206 = vunpack.c.h.b16 %v514
    %v1207 = vunpack.c.l.b16 %v515
    %v1208 = vunpack.c.h.b16 %v515
    %v1209 = vunpack.c.l.b16 %v516
    %v1210 = vunpack.c.h.b16 %v516
    %v1211 = vunpack.c.l.b16 %v517
    %v1212 = vunpack.c.h.b16 %v517
    %v1213 = vunpack.c.l.b16 %v518
    %v1214 = vunpack.c.h.b16 %v518
    %v1215 = vunpack.c.l.b16 %v519
    %v1216 = vunpack.c.h.b16 %v519
    %v1217 = vunpack.c.l.b16 %v520
    %v1218 = vunpack.c.h.b16 %v520
    %v1219 = vunpack.c.l.b16 %v521
    %v1220 = vunpack.c.h.b16 %v521
    %v1221 = vunpack.c.l.b16 %v522
    %v1222 = vunpack.c.h.b16 %v522
    %v1223 = vunpack.c.l.b16 %v523
    %v1224 = vunpack.c.h.b16 %v523
    %v1225 = vunpack.c.l.b16 %v524
    %v1226 = vunpack.c.h.b16 %v524
    %v1227 = vunpack.c.l.b16 %v525
    %v1228 = vunpack.c.h.b16 %v525
    %v1229 = vunpack.c.l.b16 %v526
    %v1230 = vunpack.c.h.b16 %v526
    %v1231 = vunpack.c.l.b16 %v527
    %v1232 = vunpack.c.h.b16 %v527
    %v1233 = vunpack.c.l.b16 %v528
    %v1234 = vunpack.c.h.b16 %v528
    %v1235 = vunpack.c.l.b16 %v529
    %v1236 = vunpack.c.h.b16 %v529
    %v1237 = vunpack.c.l.b16 %v530
    %v1238 = vunpack.c.h.b16 %v530
    %v1239 = vunpack.c.l.b16 %v531
    %v1240 = vunpack.c.h.b16 %v531
    %v1241 = vunpack.c.l.b16 %v532
    %v1242 = vunpack.c.h.b16 %v532
    %v1243 = vunpack.c.l.b16 %v533
    %v1244 = vunpack.c.h.b16 %v533
    %v1245 = vunpack.c.l.b16 %v534
    %v1246 = vunpack.c.h.b16 %v534
    %v1247 = vunpack.c.l.b16 %v535
    %v1248 = vunpack.c.h.b16 %v535
    %v1249 = vunpack.c.l.b16 %v536
    %v1250 = vunpack.c.h.b16 %v536
    %v1251 = vunpack.c.l.b16 %v537
    %v1252 = vunpack.c.h.b16 %v537
    %v1253 = vunpack.c.l.b16 %v538
    %v1254 = vunpack.c.h.b16 %v538
    %v1255 = vunpack.c.l.b16 %v539
    %v1256 = vunpack.c.h.b16 %v539
    %v1257 = vunpack.c.l.b16 %v540
    %v1258 = vunpack.c.h.b16 %v540
    %v1259 = vunpack.c.l.b16 %v541
    %v1260 = vunpack.c.h.b16 %v541
    %v1261 = vunpack.c.l.b16 %v542
    %v1262 = vunpack.c.h.b16 %v542
    %v1263 = vunpack.c.l.b16 %v543
    %v1264 = vunpack.c.h.b16 %v543
    %v1265 = vunpack.c.l.b16 %v544
    %v1266 = vunpack.c.h.b16 %v544
    %v1267 = vunpack.c.l.b16 %v545
    %v1268 = vunpack.c.h.b16 %v545
    %v1269 = vunpack.c.l.b16 %v546
    %v1270 = vunpack.c.h.b16 %v546
    %v1271 = vunpack.c.l.b16 %v547
    %v1272 = vunpack.c.h.b16 %v547
    %v1273 = vunpack.c.l.b16 %v548
    %v1274 = vunpack.c.h.b16 %v548
    %v1275 = vunpack.c.l.b16 %v549
    %v1276 = vunpack.c.h.b16 %v549
    %v1277 = vunpack.c.l.b16 %v550
    %v1278 = vunpack.c.h.b16 %v550
    %v1279 = vunpack.c.l.b16 %v551
    %v1280 = vunpack.c.h.b16 %v551
    %v1281 = vunpack.c.l.b16 %v552
    %v1282 = vunpack.c.h.b16 %v552
    %v1283 = vunpack.c.l.b16 %v553
    %v1284 = vunpack.c.h.b16 %v553
    %v1285 = vunpack.c.l.b16 %v554
    %v1286 = vunpack.c.h.b16 %v554
    %v1287 = vunpack.c.l.b16 %v555
    %v1288 = vunpack.c.h.b16 %v555
    %v1289 = vunpack.c.l.b16 %v556
    %v1290 = vunpack.c.h.b16 %v556
    %v1291 = vunpack.c.l.b16 %v557
    %v1292 = vunpack.c.h.b16 %v557
    %v1293 = vunpack.c.l.b16 %v558
    %v1294 = vunpack.c.h.b16 %v558
    %v1295 = vunpack.c.l.b16 %v559
    %v1296 = vunpack.c.h.b16 %v559
    %v1297 = vunpack.c.l.b16 %v560
    %v1298 = vunpack.c.h.b16 %v560
    %v1299 = vunpack.c.l.b16 %v561
    %v1300 = vunpack.c.h.b16 %v561
    %v1301 = vunpack.c.l.b16 %v562
    %v1302 = vunpack.c.h.b16 %v562
    %v1303 = vunpack.c.l.b16 %v563
    %v1304 = vunpack.c.h.b16 %v563
    %v1305 = vunpack.c.l.b16 %v564
    %v1306 = vunpack.c.h.b16 %v564
    %v1307 = vunpack.c.l.b16 %v565
    %v1308 = vunpack.c.h.b16 %v565
    %v1309 = vunpack.c.l.b16 %v566
    %v1310 = vunpack.c.h.b16 %v566
    %v1311 = vunpack.c.l.b16 %v567
    %v1312 = vunpack.c.h.b16 %v567
    %v1313 = vunpack.c.l.b16 %v568
    %v1314 = vunpack.c.h.b16 %v568
    %v1315 = vunpack.c.l.b16 %v569
    %v1316 = vunpack.c.h.b16 %v569
    %v1317 = vunpack.c.l.b16 %v570
    %v1318 = vunpack.c.h.b16 %v570
    %v1319 = vunpack.c.l.b16 %v571
    %v1320 = vunpack.c.h.b16 %v571
    %v1321 = vunpack.c.l.b16 %v572
    %v1322 = vunpack.c.h.b16 %v572
    %v1323 = vunpack.c.l.b16 %v573
    %v1324 = vunpack.c.h.b16 %v573
    %v1325 = vunpack.c.l.b16 %v574
    %v1326 = vunpack.c.h.b16 %v574
    %v1327 = vunpack.c.l.b16 %v575
    %v1328 = vunpack.c.h.b16 %v575
    %v1329 = vunpack.c.l.b16 %v576
    %v1330 = vunpack.c.h.b16 %v576
    %v1331 = vunpack.c.l.b16 %v577
    %v1332 = vunpack.c.h.b16 %v577
    %v1333 = vunpack.c.l.b16 %v578
    %v1334 = vunpack.c.h.b16 %v578
    %v1335 = vunpack.c.l.b16 %v579
    %v1336 = vunpack.c.h.b16 %v579
    %v1337 = vunpack.c.l.b16 %v580
    %v1338 = vunpack.c.h.b16 %v580
    %v1339 = vunpack.c.l.b16 %v581
    %v1340 = vunpack.c.h.b16 %v581
    %v1341 = vunpack.c.l.b16 %v582
    %v1342 = vunpack.c.h.b16 %v582
    %v1343 = vunpack.c.l.b16 %v583
    %v1344 = vunpack.c.h.b16 %v583
    %v1345 = vunpack.c.l.b16 %v584
    %v1346 = vunpack.c.h.b16 %v584
    %v1347 = vunpack.c.l.b16 %v585
    %v1348 = vunpack.c.h.b16 %v585
    %v1349 = vunpack.c.l.b16 %v586
    %v1350 = vunpack.c.h.b16 %v586
    %v1351 = vunpack.c.l.b16 %v587
    %v1352 = vunpack.c.h.b16 %v587
    %v1353 = vunpack.c.l.b16 %v588
    %v1354 = vunpack.c.h.b16 %v588
    %v1355 = vunpack.c.l.b16 %v589
    %v1356 = vunpack.c.h.b16 %v589
    %v1357 = vunpack.c.l.b16 %v590
    %v1358 = vunpack.c.h.b16 %v590
    %v1359 = vunpack.c.l.b16 %v591
    %v1360 = vunpack.c.h.b16 %v591
    %v1361 = vunpack.c.l.b16 %v592
    %v1362 = vunpack.c.h.b16 %v592
    %v1363 = vunpack.c.l.b16 %v593
    %v1364 = vunpack.c.h.b16 %v593
    %v1365 = vunpack.c.l.b16 %v594
    %v1366 = vunpack.c.h.b16 %v594
    %v1367 = vunpack.c.l.b16 %v595
    %v1368 = vunpack.c.h.b16 %v595
    %v1369 = vunpack.c.l.b16 %v596
    %v1370 = vunpack.c.h.b16 %v596
    %v1371 = vunpack.c.l.b16 %v597
    %v1372 = vunpack.c.h.b16 %v597
    %v1373 = vunpack.c.l.b16 %v598
    %v1374 = vunpack.c.h.b16 %v598
    %v1375 = vunpack.c.l.b16 %v599
    %v1376 = vunpack.c.h.b16 %v599
    %v1377 = vunpack.c.l.b16 %v600
    %v1378 = vunpack.c.h.b16 %v600
    %v1379 = vunpack.c.l.b16 %v601
    %v1380 = vunpack.c.h.b16 %v601
    %v1381 = vunpack.c.l.b16 %v602
    %v1382 = vunpack.c.h.b16 %v602
    %v1383 = vunpack.c.l.b16 %v603
    %v1384 = vunpack.c.h.b16 %v603
    %v1385 = vunpack.c.l.b16 %v604
    %v1386 = vunpack.c.h.b16 %v604
    %v1387 = vunpack.c.l.b16 %v605
    %v1388 = vunpack.c.h.b16 %v605
    %v1389 = vunpack.c.l.b16 %v606
    %v1390 = vunpack.c.h.b16 %v606
    %v1391 = vunpack.c.l.b16 %v607
    %v1392 = vunpack.c.h.b16 %v607
    %v1393 = vunpack.c.l.b16 %v608
    %v1394 = vunpack.c.h.b16 %v608
    %v1395 = vunpack.c.l.b16 %v609
    %v1396 = vunpack.c.h.b16 %v609
    %v1397 = vunpack.c.l.b16 %v610
    %v1398 = vunpack.c.h.b16 %v610
    %v1399 = vunpack.c.l.b16 %v611
    %v1400 = vunpack.c.h.b16 %v611
    %v1401 = vunpack.c.l.b16 %v612
    %v1402 = vunpack.c.h.b16 %v612
    %v1403 = vpack.c.b16 %v895, %v891
    %v1404 = vpack.c.b16 %v896, %v892
    %v1405 = vpack.c.b16 %v897, %v893
    %v1406 = vpack.c.b16 %v898, %v894
    %v1407 = vpack.c.b16 %v903, %v899
    %v1408 = vpack.c.b16 %v904, %v900
    %v1409 = vpack.c.b16 %v905, %v901
    %v1410 = vpack.c.b16 %v906, %v902
    %v1411 = vpack.c.b16 %v911, %v907
    %v1412 = vpack.c.b16 %v912, %v908
    %v1413 = vpack.c.b16 %v913, %v909
    %v1414 = vpack.c.b16 %v914, %v910
    %v1415 = vpack.c.b16 %v919, %v915
    %v1416 = vpack.c.b16 %v920, %v916
    %v1417 = vpack.c.b16 %v921, %v917
    %v1418 = vpack.c.b16 %v922, %v918
    %v1419 = vpack.c.b16 %v927, %v923
    %v1420 = vpack.c.b16 %v928, %v924
    %v1421 = vpack.c.b16 %v929, %v925
    %v1422 = vpack.c.b16 %v930, %v926
    %v1423 = vpack.c.b16 %v935, %v931
    %v1424 = vpack.c.b16 %v936, %v932
    %v1425 = vpack.c.b16 %v937, %v933
    %v1426 = vpack.c.b16 %v938, %v934
    %v1427 = vpack.c.b16 %v943, %v939
    %v1428 = vpack.c.b16 %v944, %v940
    %v1429 = vpack.c.b16 %v945, %v941
    %v1430 = vpack.c.b16 %v946, %v942
    %v1431 = vpack.c.b16 %v951, %v947
    %v1432 = vpack.c.b16 %v952, %v948
    %v1433 = vpack.c.b16 %v953, %v949
    %v1434 = vpack.c.b16 %v954, %v950
    %v1435 = vpack.c.b16 %v959, %v955
    %v1436 = vpack.c.b16 %v960, %v956
    %v1437 = vpack.c.b16 %v961, %v957
    %v1438 = vpack.c.b16 %v962, %v958
    %v1439 = vpack.c.b16 %v967, %v963
    %v1440 = vpack.c.b16 %v968, %v964
    %v1441 = vpack.c.b16 %v969, %v965
    %v1442 = vpack.c.b16 %v970, %v966
    %v1443 = vpack.c.b16 %v975, %v971
    %v1444 = vpack.c.b16 %v976, %v972
    %v1445 = vpack.c.b16 %v977, %v973
    %v1446 = vpack.c.b16 %v978, %v974
    %v1447 = vpack.c.b16 %v983, %v979
    %v1448 = vpack.c.b16 %v984, %v980
    %v1449 = vpack.c.b16 %v985, %v981
    %v1450 = vpack.c.b16 %v986, %v982
    %v1451 = vpack.c.b16 %v991, %v987
    %v1452 = vpack.c.b16 %v992, %v988
    %v1453 = vpack.c.b16 %v993, %v989
    %v1454 = vpack.c.b16 %v994, %v990
    %v1455 = vpack.c.b16 %v999, %v995
    %v1456 = vpack.c.b16 %v1000, %v996
    %v1457 = vpack.c.b16 %v1001, %v997
    %v1458 = vpack.c.b16 %v1002, %v998
    %v1459 = vpack.c.b16 %v1007, %v1003
    %v1460 = vpack.c.b16 %v1008, %v1004
    %v1461 = vpack.c.b16 %v1009, %v1005
    %v1462 = vpack.c.b16 %v1010, %v1006
    %v1463 = vpack.c.b16 %v1015, %v1011
    %v1464 = vpack.c.b16 %v1016, %v1012
    %v1465 = vpack.c.b16 %v1017, %v1013
    %v1466 = vpack.c.b16 %v1018, %v1014
    %v1467 = vpack.c.b16 %v1023, %v1019
    %v1468 = vpack.c.b16 %v1024, %v1020
    %v1469 = vpack.c.b16 %v1025, %v1021
    %v1470 = vpack.c.b16 %v1026, %v1022
    %v1471 = vpack.c.b16 %v1031, %v1027
    %v1472 = vpack.c.b16 %v1032, %v1028
    %v1473 = vpack.c.b16 %v1033, %v1029
    %v1474 = vpack.c.b16 %v1034, %v1030
    %v1475 = vpack.c.b16 %v1039, %v1035
    %v1476 = vpack.c.b16 %v1040, %v1036
    %v1477 = vpack.c.b16 %v1041, %v1037
    %v1478 = vpack.c.b16 %v1042, %v1038
    %v1479 = vpack.c.b16 %v1047, %v1043
    %v1480 = vpack.c.b16 %v1048, %v1044
    %v1481 = vpack.c.b16 %v1049, %v1045
    %v1482 = vpack.c.b16 %v1050, %v1046
    %v1483 = vpack.c.b16 %v1055, %v1051
    %v1484 = vpack.c.b16 %v1056, %v1052
    %v1485 = vpack.c.b16 %v1057, %v1053
    %v1486 = vpack.c.b16 %v1058, %v1054
    %v1487 = vpack.c.b16 %v1063, %v1059
    %v1488 = vpack.c.b16 %v1064, %v1060
    %v1489 = vpack.c.b16 %v1065, %v1061
    %v1490 = vpack.c.b16 %v1066, %v1062
    %v1491 = vpack.c.b16 %v1071, %v1067
    %v1492 = vpack.c.b16 %v1072, %v1068
    %v1493 = vpack.c.b16 %v1073, %v1069
    %v1494 = vpack.c.b16 %v1074, %v1070
    %v1495 = vpack.c.b16 %v1079, %v1075
    %v1496 = vpack.c.b16 %v1080, %v1076
    %v1497 = vpack.c.b16 %v1081, %v1077
    %v1498 = vpack.c.b16 %v1082, %v1078
    %v1499 = vpack.c.b16 %v1087, %v1083
    %v1500 = vpack.c.b16 %v1088, %v1084
    %v1501 = vpack.c.b16 %v1089, %v1085
    %v1502 = vpack.c.b16 %v1090, %v1086
    %v1503 = vpack.c.b16 %v1095, %v1091
    %v1504 = vpack.c.b16 %v1096, %v1092
    %v1505 = vpack.c.b16 %v1097, %v1093
    %v1506 = vpack.c.b16 %v1098, %v1094
    %v1507 = vpack.c.b16 %v1103, %v1099
    %v1508 = vpack.c.b16 %v1104, %v1100
    %v1509 = vpack.c.b16 %v1105, %v1101
    %v1510 = vpack.c.b16 %v1106, %v1102
    %v1511 = vpack.c.b16 %v1111, %v1107
    %v1512 = vpack.c.b16 %v1112, %v1108
    %v1513 = vpack.c.b16 %v1113, %v1109
    %v1514 = vpack.c.b16 %v1114, %v1110
    %v1515 = vpack.c.b16 %v1119, %v1115
    %v1516 = vpack.c.b16 %v1120, %v1116
    %v1517 = vpack.c.b16 %v1121, %v1117
    %v1518 = vpack.c.b16 %v1122, %v1118
    %v1519 = vpack.c.b16 %v1127, %v1123
    %v1520 = vpack.c.b16 %v1128, %v1124
    %v1521 = vpack.c.b16 %v1129, %v1125
    %v1522 = vpack.c.b16 %v1130, %v1126
    %v1523 = vpack.c.b16 %v1135, %v1131
    %v1524 = vpack.c.b16 %v1136, %v1132
    %v1525 = vpack.c.b16 %v1137, %v1133
    %v1526 = vpack.c.b16 %v1138, %v1134
    %v1527 = vpack.c.b16 %v1143, %v1139
    %v1528 = vpack.c.b16 %v1144, %v1140
    %v1529 = vpack.c.b16 %v1145, %v1141
    %v1530 = vpack.c.b16 %v1146, %v1142
    %v1531 = vpack.c.b16 %v1151, %v1147
    %v1532 = vpack.c.b16 %v1152, %v1148
    %v1533 = vpack.c.b16 %v1153, %v1149
    %v1534 = vpack.c.b16 %v1154, %v1150
    %v1535 = vpack.c.b16 %v1159, %v1155
    %v1536 = vpack.c.b16 %v1160, %v1156
    %v1537 = vpack.c.b16 %v1161, %v1157
    %v1538 = vpack.c.b16 %v1162, %v1158
    %v1539 = vpack.c.b16 %v1167, %v1163
    %v1540 = vpack.c.b16 %v1168, %v1164
    %v1541 = vpack.c.b16 %v1169, %v1165
    %v1542 = vpack.c.b16 %v1170, %v1166
    %v1543 = vpack.c.b16 %v1175, %v1171
    %v1544 = vpack.c.b16 %v1176, %v1172
    %v1545 = vpack.c.b16 %v1177, %v1173
    %v1546 = vpack.c.b16 %v1178, %v1174
    %v1547 = vpack.c.b16 %v1183, %v1179
    %v1548 = vpack.c.b16 %v1184, %v1180
    %v1549 = vpack.c.b16 %v1185, %v1181
    %v1550 = vpack.c.b16 %v1186, %v1182
    %v1551 = vpack.c.b16 %v1191, %v1187
    %v1552 = vpack.c.b16 %v1192, %v1188
    %v1553 = vpack.c.b16 %v1193, %v1189
    %v1554 = vpack.c.b16 %v1194, %v1190
    %v1555 = vpack.c.b16 %v1199, %v1195
    %v1556 = vpack.c.b16 %v1200, %v1196
    %v1557 = vpack.c.b16 %v1201, %v1197
    %v1558 = vpack.c.b16 %v1202, %v1198
    %v1559 = vpack.c.b16 %v1207, %v1203
    %v1560 = vpack.c.b16 %v1208, %v1204
    %v1561 = vpack.c.b16 %v1209, %v1205
    %v1562 = vpack.c.b16 %v1210, %v1206
    %v1563 = vpack.c.b16 %v1215, %v1211
    %v1564 = vpack.c.b16 %v1216, %v1212
    %v1565 = vpack.c.b16 %v1217, %v1213
    %v1566 = vpack.c.b16 %v1218, %v1214
    %v1567 = vpack.c.b16 %v1223, %v1219
    %v1568 = vpack.c.b16 %v1224, %v1220
    %v1569 = vpack.c.b16 %v1225, %v1221
    %v1570 = vpack.c.b16 %v1226, %v1222
    %v1571 = vpack.c.b16 %v1231, %v1227
    %v1572 = vpack.c.b16 %v1232, %v1228
    %v1573 = vpack.c.b16 %v1233, %v1229
    %v1574 = vpack.c.b16 %v1234, %v1230
    %v1575 = vpack.c.b16 %v1239, %v1235
    %v1576 = vpack.c.b16 %v1240, %v1236
    %v1577 = vpack.c.b16 %v1241, %v1237
    %v1578 = vpack.c.b16 %v1242, %v1238
    %v1579 = vpack.c.b16 %v1247, %v1243
    %v1580 = vpack.c.b16 %v1248, %v1244
    %v1581 = vpack.c.b16 %v1249, %v1245
    %v1582 = vpack.c.b16 %v1250, %v1246
    %v1583 = vpack.c.b16 %v1255, %v1251
    %v1584 = vpack.c.b16 %v1256, %v1252
    %v1585 = vpack.c.b16 %v1257, %v1253
    %v1586 = vpack.c.b16 %v1258, %v1254
    %v1587 = vpack.c.b16 %v1263, %v1259
    %v1588 = vpack.c.b16 %v1264, %v1260
    %v1589 = vpack.c.b16 %v1265, %v1261
    %v1590 = vpack.c.b16 %v1266, %v1262
    %v1591 = vpack.c.b16 %v1271, %v1267
    %v1592 = vpack.c.b16 %v1272, %v1268
    %v1593 = vpack.c.b16 %v1273, %v1269
    %v1594 = vpack.c.b16 %v1274, %v1270
    %v1595 = vpack.c.b16 %v1279, %v1275
    %v1596 = vpack.c.b16 %v1280, %v1276
    %v1597 = vpack.c.b16 %v1281, %v1277
    %v1598 = vpack.c.b16 %v1282, %v1278
    %v1599 = vpack.c.b16 %v1287, %v1283
    %v1600 = vpack.c.b16 %v1288, %v1284
    %v1601 = vpack.c.b16 %v1289, %v1285
    %v1602 = vpack.c.b16 %v1290, %v1286
    %v1603 = vpack.c.b16 %v1295, %v1291
    %v1604 = vpack.c.b16 %v1296, %v1292
    %v1605 = vpack.c.b16 %v1297, %v1293
    %v1606 = vpack.c.b16 %v1298, %v1294
    %v1607 = vpack.c.b16 %v1303, %v1299
    %v1608 = vpack.c.b16 %v1304, %v1300
    %v1609 = vpack.c.b16 %v1305, %v1301
    %v1610 = vpack.c.b16 %v1306, %v1302
    %v1611 = vpack.c.b16 %v1311, %v1307
    %v1612 = vpack.c.b16 %v1312, %v1308
    %v1613 = vpack.c.b16 %v1313, %v1309
    %v1614 = vpack.c.b16 %v1314, %v1310
    %v1615 = vpack.c.b16 %v1319, %v1315
    %v1616 = vpack.c.b16 %v1320, %v1316
    %v1617 = vpack.c.b16 %v1321, %v1317
    %v1618 = vpack.c.b16 %v1322, %v1318
    %v1619 = vpack.c.b16 %v1327, %v1323
    %v1620 = vpack.c.b16 %v1328, %v1324
    %v1621 = vpack.c.b16 %v1329, %v1325
    %v1622 = vpack.c.b16 %v1330, %v1326
    %v1623 = vpack.c.b16 %v1335, %v1331
    %v1624 = vpack.c.b16 %v1336, %v1332
    %v1625 = vpack.c.b16 %v1337, %v1333
    %v1626 = vpack.c.b16 %v1338, %v1334
    %v1627 = vpack.c.b16 %v1343, %v1339
    %v1628 = vpack.c.b16 %v1344, %v1340
    %v1629 = vpack.c.b16 %v1345, %v1341
    %v1630 = vpack.c.b16 %v1346, %v1342
    %v1631 = vpack.c.b16 %v1351, %v1347
    %v1632 = vpack.c.b16 %v1352, %v1348
    %v1633 = vpack.c.b16 %v1353, %v1349
    %v1634 = vpack.c.b16 %v1354, %v1350
    %v1635 = vpack.c.b16 %v1359, %v1355
    %v1636 = vpack.c.b16 %v1360, %v1356
    %v1637 = vpack.c.b16 %v1361, %v1357
    %v1638 = vpack.c.b16 %v1362, %v1358
    %v1639 = vpack.c.b16 %v1367, %v1363
    %v1640 = vpack.c.b16 %v1368, %v1364
    %v1641 = vpack.c.b16 %v1369, %v1365
    %v1642 = vpack.c.b16 %v1370, %v1366
    %v1643 = vpack.c.b16 %v1375, %v1371
    %v1644 = vpack.c.b16 %v1376, %v1372
    %v1645 = vpack.c.b16 %v1377, %v1373
    %v1646 = vpack.c.b16 %v1378, %v1374
    %v1647 = vpack.c.b16 %v1383, %v1379
    %v1648 = vpack.c.b16 %v1384, %v1380
    %v1649 = vpack.c.b16 %v1385, %v1381
    %v1650 = vpack.c.b16 %v1386, %v1382
    %v1651 = vpack.c.b16 %v1391, %v1387
    %v1652 = vpack.c.b16 %v1392, %v1388
    %v1653 = vpack.c.b16 %v1393, %v1389
    %v1654 = vpack.c.b16 %v1394, %v1390
    %v1655 = vpack.c.b16 %v1399, %v1395
    %v1656 = vpack.c.b16 %v1400, %v1396
    %v1657 = vpack.c.b16 %v1401, %v1397
    %v1658 = vpack.c.b16 %v1402, %v1398
    %1915 = vmatprep.subr.bf16.mxu0 %v1404
    %1916 = vmatpush1.bf16.msra.mxu0 %v1403
    %1917 = vmatprep.subr.bf16.mxu0 %v1408
    %1918 = vmatpush1.bf16.msra.mxu0 %v1407
    %1919 = vmatprep.subr.bf16.mxu0 %v1412
    %1920 = vmatpush1.bf16.msra.mxu0 %v1411
    %1921 = vmatprep.subr.bf16.mxu0 %v1416
    %1922 = vmatpush1.bf16.msra.mxu0 %v1415
    %1923 = vmatprep.subr.bf16.mxu0 %v1420
    %1924 = vmatpush1.bf16.msra.mxu0 %v1419
    %1925 = vmatprep.subr.bf16.mxu0 %v1424
    %1926 = vmatpush1.bf16.msra.mxu0 %v1423
    %1927 = vmatprep.subr.bf16.mxu0 %v1428
    %1928 = vmatpush1.bf16.msra.mxu0 %v1427
    %1929 = vmatprep.subr.bf16.mxu0 %v1432
    %1930 = vmatpush1.bf16.msra.mxu0 %v1431
    %1931 = vmatprep.subr.bf16.mxu0 %v1436
    %1932 = vmatpush1.bf16.msra.mxu0 %v1435
    %1933 = vmatprep.subr.bf16.mxu0 %v1440
    %1934 = vmatpush1.bf16.msra.mxu0 %v1439
    %1935 = vmatprep.subr.bf16.mxu0 %v1444
    %1936 = vmatpush1.bf16.msra.mxu0 %v1443
    %1937 = vmatprep.subr.bf16.mxu0 %v1448
    %1938 = vmatpush1.bf16.msra.mxu0 %v1447
    %1939 = vmatprep.subr.bf16.mxu0 %v1452
    %1940 = vmatpush1.bf16.msra.mxu0 %v1451
    %1941 = vmatprep.subr.bf16.mxu0 %v1456
    %1942 = vmatpush1.bf16.msra.mxu0 %v1455
    %1943 = vmatprep.subr.bf16.mxu0 %v1460
    %1944 = vmatpush1.bf16.msra.mxu0 %v1459
    %1945 = vmatprep.subr.bf16.mxu0 %v1464
    %1946 = vmatpush1.bf16.msra.mxu0 %v1463
    %1947 = vmatprep.mubr.bf16.mxu0 %v350
    %1948 = vmatmul.mubr.bf16.gmra.mrb[0].mxu0 %v349
    %v1949 = vpop.f32.mrb[0].mxu0
    %v1950 = vadd.f32 %v618, %v1949
    %v1951 = vpop.f32.mrb[0].mxu0
    %v1952 = vadd.f32 %v622, %v1951
    %v1953 = vpop.f32.mrb[0].mxu0
    %v1954 = vadd.f32 %v618, %v1953
    %v1955 = vpop.f32.mrb[0].mxu0
    %v1956 = vadd.f32 %v622, %v1955
    %1957 = vdwg.mxu0
    %1958 = vmatprep.subr.bf16.mxu0 %v1468
    %1959 = vmatpush1.bf16.msra.mxu0 %v1467
    %1960 = vmatprep.subr.bf16.mxu0 %v1472
    %1961 = vmatpush1.bf16.msra.mxu0 %v1471
    %1962 = vmatprep.subr.bf16.mxu0 %v1476
    %1963 = vmatpush1.bf16.msra.mxu0 %v1475
    %1964 = vmatprep.subr.bf16.mxu0 %v1480
    %1965 = vmatpush1.bf16.msra.mxu0 %v1479
    %1966 = vmatprep.subr.bf16.mxu0 %v1484
    %1967 = vmatpush1.bf16.msra.mxu0 %v1483
    %1968 = vmatprep.subr.bf16.mxu0 %v1488
    %1969 = vmatpush1.bf16.msra.mxu0 %v1487
    %1970 = vmatprep.subr.bf16.mxu0 %v1492
    %1971 = vmatpush1.bf16.msra.mxu0 %v1491
    %1972 = vmatprep.subr.bf16.mxu0 %v1496
    %1973 = vmatpush1.bf16.msra.mxu0 %v1495
    %1974 = vmatprep.subr.bf16.mxu0 %v1500
    %1975 = vmatpush1.bf16.msra.mxu0 %v1499
    %1976 = vmatprep.subr.bf16.mxu0 %v1504
    %1977 = vmatpush1.bf16.msra.mxu0 %v1503
    %1978 = vmatprep.subr.bf16.mxu0 %v1508
    %1979 = vmatpush1.bf16.msra.mxu0 %v1507
    %1980 = vmatprep.subr.bf16.mxu0 %v1512
    %1981 = vmatpush1.bf16.msra.mxu0 %v1511
    %1982 = vmatprep.subr.bf16.mxu0 %v1516
    %1983 = vmatpush1.bf16.msra.mxu0 %v1515
    %1984 = vmatprep.subr.bf16.mxu0 %v1520
    %1985 = vmatpush1.bf16.msra.mxu0 %v1519
    %1986 = vmatprep.subr.bf16.mxu0 %v1524
    %1987 = vmatpush1.bf16.msra.mxu0 %v1523
    %1988 = vmatprep.subr.bf16.mxu0 %v1528
    %1989 = vmatpush1.bf16.msra.mxu0 %v1527
    %1990 = vmatprep.mubr.bf16.mxu0 %v352
    %1991 = vmatmul.mubr.bf16.gmra.mrb[0].mxu0 %v351
    %v1992 = vpop.f32.mrb[0].mxu0
    %v1993 = vadd.f32 %v1950, %v1992
    %v1994 = vpop.f32.mrb[0].mxu0
    %v1995 = vadd.f32 %v1952, %v1994
    %v1996 = vpop.f32.mrb[0].mxu0
    %v1997 = vadd.f32 %v1954, %v1996
    %v1998 = vpop.f32.mrb[0].mxu0
    %v1999 = vadd.f32 %v1956, %v1998
    %2000 = vdwg.mxu0
    %2001 = vmatprep.subr.bf16.mxu0 %v1532
    %2002 = vmatpush1.bf16.msra.mxu0 %v1531
    %2003 = vmatprep.subr.bf16.mxu0 %v1536
    %2004 = vmatpush1.bf16.msra.mxu0 %v1535
    %2005 = vmatprep.subr.bf16.mxu0 %v1540
    %2006 = vmatpush1.bf16.msra.mxu0 %v1539
    %2007 = vmatprep.subr.bf16.mxu0 %v1544
    %2008 = vmatpush1.bf16.msra.mxu0 %v1543
    %2009 = vmatprep.subr.bf16.mxu0 %v1548
    %2010 = vmatpush1.bf16.msra.mxu0 %v1547
    %2011 = vmatprep.subr.bf16.mxu0 %v1552
    %2012 = vmatpush1.bf16.msra.mxu0 %v1551
    %2013 = vmatprep.subr.bf16.mxu0 %v1556
    %2014 = vmatpush1.bf16.msra.mxu0 %v1555
    %2015 = vmatprep.subr.bf16.mxu0 %v1560
    %2016 = vmatpush1.bf16.msra.mxu0 %v1559
    %2017 = vmatprep.subr.bf16.mxu0 %v1564
    %2018 = vmatpush1.bf16.msra.mxu0 %v1563
    %2019 = vmatprep.subr.bf16.mxu0 %v1568
    %2020 = vmatpush1.bf16.msra.mxu0 %v1567
    %2021 = vmatprep.subr.bf16.mxu0 %v1572
    %2022 = vmatpush1.bf16.msra.mxu0 %v1571
    %2023 = vmatprep.subr.bf16.mxu0 %v1576
    %2024 = vmatpush1.bf16.msra.mxu0 %v1575
    %2025 = vmatprep.subr.bf16.mxu0 %v1580
    %2026 = vmatpush1.bf16.msra.mxu0 %v1579
    %2027 = vmatprep.subr.bf16.mxu0 %v1584
    %2028 = vmatpush1.bf16.msra.mxu0 %v1583
    %2029 = vmatprep.subr.bf16.mxu0 %v1588
    %2030 = vmatpush1.bf16.msra.mxu0 %v1587
    %2031 = vmatprep.subr.bf16.mxu0 %v1592
    %2032 = vmatpush1.bf16.msra.mxu0 %v1591
    %2033 = vmatprep.mubr.bf16.mxu0 %v354
    %2034 = vmatmul.mubr.bf16.gmra.mrb[0].mxu0 %v353
    %v2035 = vpop.f32.mrb[0].mxu0
    %v2036 = vadd.f32 %v1993, %v2035
    %v2037 = vpop.f32.mrb[0].mxu0
    %v2038 = vadd.f32 %v1995, %v2037
    %v2039 = vpop.f32.mrb[0].mxu0
    %v2040 = vadd.f32 %v1997, %v2039
    %v2041 = vpop.f32.mrb[0].mxu0
    %v2042 = vadd.f32 %v1999, %v2041
    %2043 = vdwg.mxu0
    %2044 = vmatprep.subr.bf16.mxu0 %v1596
    %2045 = vmatpush1.bf16.msra.mxu0 %v1595
    %2046 = vmatprep.subr.bf16.mxu0 %v1600
    %2047 = vmatpush1.bf16.msra.mxu0 %v1599
    %2048 = vmatprep.subr.bf16.mxu0 %v1604
    %2049 = vmatpush1.bf16.msra.mxu0 %v1603
    %2050 = vmatprep.subr.bf16.mxu0 %v1608
    %2051 = vmatpush1.bf16.msra.mxu0 %v1607
    %2052 = vmatprep.subr.bf16.mxu0 %v1612
    %2053 = vmatpush1.bf16.msra.mxu0 %v1611
    %2054 = vmatprep.subr.bf16.mxu0 %v1616
    %2055 = vmatpush1.bf16.msra.mxu0 %v1615
    %2056 = vmatprep.subr.bf16.mxu0 %v1620
    %2057 = vmatpush1.bf16.msra.mxu0 %v1619
    %2058 = vmatprep.subr.bf16.mxu0 %v1624
    %2059 = vmatpush1.bf16.msra.mxu0 %v1623
    %2060 = vmatprep.subr.bf16.mxu0 %v1628
    %2061 = vmatpush1.bf16.msra.mxu0 %v1627
    %2062 = vmatprep.subr.bf16.mxu0 %v1632
    %2063 = vmatpush1.bf16.msra.mxu0 %v1631
    %2064 = vmatprep.subr.bf16.mxu0 %v1636
    %2065 = vmatpush1.bf16.msra.mxu0 %v1635
    %2066 = vmatprep.subr.bf16.mxu0 %v1640
    %2067 = vmatpush1.bf16.msra.mxu0 %v1639
    %2068 = vmatprep.subr.bf16.mxu0 %v1644
    %2069 = vmatpush1.bf16.msra.mxu0 %v1643
    %2070 = vmatprep.subr.bf16.mxu0 %v1648
    %2071 = vmatpush1.bf16.msra.mxu0 %v1647
    %2072 = vmatprep.subr.bf16.mxu0 %v1652
    %2073 = vmatpush1.bf16.msra.mxu0 %v1651
    %2074 = vmatprep.subr.bf16.mxu0 %v1656
    %2075 = vmatpush1.bf16.msra.mxu0 %v1655
    %2076 = vmatprep.mubr.bf16.mxu0 %v356
    %2077 = vmatmul.mubr.bf16.gmra.mrb[0].mxu0 %v355
    %v2078 = vpop.f32.mrb[0].mxu0
    %v2079 = vadd.f32 %v2036, %v2078
    %v2080 = vpop.f32.mrb[0].mxu0
    %v2081 = vadd.f32 %v2038, %v2080
    %v2082 = vpop.f32.mrb[0].mxu0
    %v2083 = vadd.f32 %v2040, %v2082
    %v2084 = vpop.f32.mrb[0].mxu0
    %v2085 = vadd.f32 %v2042, %v2084
    %2086 = vdwg.mxu0
    %2087 = vmatprep.subr.bf16.mxu0 %v1406
    %2088 = vmatpush1.bf16.msra.mxu0 %v1405
    %2089 = vmatprep.subr.bf16.mxu0 %v1410
    %2090 = vmatpush1.bf16.msra.mxu0 %v1409
    %2091 = vmatprep.subr.bf16.mxu0 %v1414
    %2092 = vmatpush1.bf16.msra.mxu0 %v1413
    %2093 = vmatprep.subr.bf16.mxu0 %v1418
    %2094 = vmatpush1.bf16.msra.mxu0 %v1417
    %2095 = vmatprep.subr.bf16.mxu0 %v1422
    %2096 = vmatpush1.bf16.msra.mxu0 %v1421
    %2097 = vmatprep.subr.bf16.mxu0 %v1426
    %2098 = vmatpush1.bf16.msra.mxu0 %v1425
    %2099 = vmatprep.subr.bf16.mxu0 %v1430
    %2100 = vmatpush1.bf16.msra.mxu0 %v1429
    %2101 = vmatprep.subr.bf16.mxu0 %v1434
    %2102 = vmatpush1.bf16.msra.mxu0 %v1433
    %2103 = vmatprep.subr.bf16.mxu0 %v1438
    %2104 = vmatpush1.bf16.msra.mxu0 %v1437
    %2105 = vmatprep.subr.bf16.mxu0 %v1442
    %2106 = vmatpush1.bf16.msra.mxu0 %v1441
    %2107 = vmatprep.subr.bf16.mxu0 %v1446
    %2108 = vmatpush1.bf16.msra.mxu0 %v1445
    %2109 = vmatprep.subr.bf16.mxu0 %v1450
    %2110 = vmatpush1.bf16.msra.mxu0 %v1449
    %2111 = vmatprep.subr.bf16.mxu0 %v1454
    %2112 = vmatpush1.bf16.msra.mxu0 %v1453
    %2113 = vmatprep.subr.bf16.mxu0 %v1458
    %2114 = vmatpush1.bf16.msra.mxu0 %v1457
    %2115 = vmatprep.subr.bf16.mxu0 %v1462
    %2116 = vmatpush1.bf16.msra.mxu0 %v1461
    %2117 = vmatprep.subr.bf16.mxu0 %v1466
    %2118 = vmatpush1.bf16.msra.mxu0 %v1465
    %2119 = vmatprep.mubr.bf16.mxu0 %v350
    %2120 = vmatmul.mubr.bf16.gmra.mrb[0].mxu0 %v349
    %v2121 = vpop.f32.mrb[0].mxu0
    %v2122 = vadd.f32 %v626, %v2121
    %v2123 = vpop.f32.mrb[0].mxu0
    %v2124 = vadd.f32 %v630, %v2123
    %v2125 = vpop.f32.mrb[0].mxu0
    %v2126 = vadd.f32 %v626, %v2125
    %v2127 = vpop.f32.mrb[0].mxu0
    %v2128 = vadd.f32 %v630, %v2127
    %2129 = vdwg.mxu0
    %2130 = vmatprep.subr.bf16.mxu0 %v1470
    %2131 = vmatpush1.bf16.msra.mxu0 %v1469
    %2132 = vmatprep.subr.bf16.mxu0 %v1474
    %2133 = vmatpush1.bf16.msra.mxu0 %v1473
    %2134 = vmatprep.subr.bf16.mxu0 %v1478
    %2135 = vmatpush1.bf16.msra.mxu0 %v1477
    %2136 = vmatprep.subr.bf16.mxu0 %v1482
    %2137 = vmatpush1.bf16.msra.mxu0 %v1481
    %2138 = vmatprep.subr.bf16.mxu0 %v1486
    %2139 = vmatpush1.bf16.msra.mxu0 %v1485
    %2140 = vmatprep.subr.bf16.mxu0 %v1490
    %2141 = vmatpush1.bf16.msra.mxu0 %v1489
    %2142 = vmatprep.subr.bf16.mxu0 %v1494
    %2143 = vmatpush1.bf16.msra.mxu0 %v1493
    %2144 = vmatprep.subr.bf16.mxu0 %v1498
    %2145 = vmatpush1.bf16.msra.mxu0 %v1497
    %2146 = vmatprep.subr.bf16.mxu0 %v1502
    %2147 = vmatpush1.bf16.msra.mxu0 %v1501
    %2148 = vmatprep.subr.bf16.mxu0 %v1506
    %2149 = vmatpush1.bf16.msra.mxu0 %v1505
    %2150 = vmatprep.subr.bf16.mxu0 %v1510
    %2151 = vmatpush1.bf16.msra.mxu0 %v1509
    %2152 = vmatprep.subr.bf16.mxu0 %v1514
    %2153 = vmatpush1.bf16.msra.mxu0 %v1513
    %2154 = vmatprep.subr.bf16.mxu0 %v1518
    %2155 = vmatpush1.bf16.msra.mxu0 %v1517
    %2156 = vmatprep.subr.bf16.mxu0 %v1522
    %2157 = vmatpush1.bf16.msra.mxu0 %v1521
    %2158 = vmatprep.subr.bf16.mxu0 %v1526
    %2159 = vmatpush1.bf16.msra.mxu0 %v1525
    %2160 = vmatprep.subr.bf16.mxu0 %v1530
    %2161 = vmatpush1.bf16.msra.mxu0 %v1529
    %2162 = vmatprep.mubr.bf16.mxu0 %v352
    %2163 = vmatmul.mubr.bf16.gmra.mrb[0].mxu0 %v351
    %v2164 = vpop.f32.mrb[0].mxu0
    %v2165 = vadd.f32 %v2122, %v2164
    %v2166 = vpop.f32.mrb[0].mxu0
    %v2167 = vadd.f32 %v2124, %v2166
    %v2168 = vpop.f32.mrb[0].mxu0
    %v2169 = vadd.f32 %v2126, %v2168
    %v2170 = vpop.f32.mrb[0].mxu0
    %v2171 = vadd.f32 %v2128, %v2170
    %2172 = vdwg.mxu0
    %2173 = vmatprep.subr.bf16.mxu0 %v1534
    %2174 = vmatpush1.bf16.msra.mxu0 %v1533
    %2175 = vmatprep.subr.bf16.mxu0 %v1538
    %2176 = vmatpush1.bf16.msra.mxu0 %v1537
    %2177 = vmatprep.subr.bf16.mxu0 %v1542
    %2178 = vmatpush1.bf16.msra.mxu0 %v1541
    %2179 = vmatprep.subr.bf16.mxu0 %v1546
    %2180 = vmatpush1.bf16.msra.mxu0 %v1545
    %2181 = vmatprep.subr.bf16.mxu0 %v1550
    %2182 = vmatpush1.bf16.msra.mxu0 %v1549
    %2183 = vmatprep.subr.bf16.mxu0 %v1554
    %2184 = vmatpush1.bf16.msra.mxu0 %v1553
    %2185 = vmatprep.subr.bf16.mxu0 %v1558
    %2186 = vmatpush1.bf16.msra.mxu0 %v1557
    %2187 = vmatprep.subr.bf16.mxu0 %v1562
    %2188 = vmatpush1.bf16.msra.mxu0 %v1561
    %2189 = vmatprep.subr.bf16.mxu0 %v1566
    %2190 = vmatpush1.bf16.msra.mxu0 %v1565
    %2191 = vmatprep.subr.bf16.mxu0 %v1570
    %2192 = vmatpush1.bf16.msra.mxu0 %v1569
    %2193 = vmatprep.subr.bf16.mxu0 %v1574
    %2194 = vmatpush1.bf16.msra.mxu0 %v1573
    %2195 = vmatprep.subr.bf16.mxu0 %v1578
    %2196 = vmatpush1.bf16.msra.mxu0 %v1577
    %2197 = vmatprep.subr.bf16.mxu0 %v1582
    %2198 = vmatpush1.bf16.msra.mxu0 %v1581
    %2199 = vmatprep.subr.bf16.mxu0 %v1586
    %2200 = vmatpush1.bf16.msra.mxu0 %v1585
    %2201 = vmatprep.subr.bf16.mxu0 %v1590
    %2202 = vmatpush1.bf16.msra.mxu0 %v1589
    %2203 = vmatprep.subr.bf16.mxu0 %v1594
    %2204 = vmatpush1.bf16.msra.mxu0 %v1593
    %2205 = vmatprep.mubr.bf16.mxu0 %v354
    %2206 = vmatmul.mubr.bf16.gmra.mrb[0].mxu0 %v353
    %v2207 = vpop.f32.mrb[0].mxu0
    %v2208 = vadd.f32 %v2165, %v2207
    %v2209 = vpop.f32.mrb[0].mxu0
    %v2210 = vadd.f32 %v2167, %v2209
    %v2211 = vpop.f32.mrb[0].mxu0
    %v2212 = vadd.f32 %v2169, %v2211
    %v2213 = vpop.f32.mrb[0].mxu0
    %v2214 = vadd.f32 %v2171, %v2213
    %2215 = vdwg.mxu0
    %2216 = vmatprep.subr.bf16.mxu0 %v1598
    %2217 = vmatpush1.bf16.msra.mxu0 %v1597
    %2218 = vmatprep.subr.bf16.mxu0 %v1602
    %2219 = vmatpush1.bf16.msra.mxu0 %v1601
    %2220 = vmatprep.subr.bf16.mxu0 %v1606
    %2221 = vmatpush1.bf16.msra.mxu0 %v1605
    %2222 = vmatprep.subr.bf16.mxu0 %v1610
    %2223 = vmatpush1.bf16.msra.mxu0 %v1609
    %2224 = vmatprep.subr.bf16.mxu0 %v1614
    %2225 = vmatpush1.bf16.msra.mxu0 %v1613
    %2226 = vmatprep.subr.bf16.mxu0 %v1618
    %2227 = vmatpush1.bf16.msra.mxu0 %v1617
    %2228 = vmatprep.subr.bf16.mxu0 %v1622
    %2229 = vmatpush1.bf16.msra.mxu0 %v1621
    %2230 = vmatprep.subr.bf16.mxu0 %v1626
    %2231 = vmatpush1.bf16.msra.mxu0 %v1625
    %2232 = vmatprep.subr.bf16.mxu0 %v1630
    %2233 = vmatpush1.bf16.msra.mxu0 %v1629
    %2234 = vmatprep.subr.bf16.mxu0 %v1634
    %2235 = vmatpush1.bf16.msra.mxu0 %v1633
    %2236 = vmatprep.subr.bf16.mxu0 %v1638
    %2237 = vmatpush1.bf16.msra.mxu0 %v1637
    %2238 = vmatprep.subr.bf16.mxu0 %v1642
    %2239 = vmatpush1.bf16.msra.mxu0 %v1641
    %2240 = vmatprep.subr.bf16.mxu0 %v1646
    %2241 = vmatpush1.bf16.msra.mxu0 %v1645
    %2242 = vmatprep.subr.bf16.mxu0 %v1650
    %2243 = vmatpush1.bf16.msra.mxu0 %v1649
    %2244 = vmatprep.subr.bf16.mxu0 %v1654
    %2245 = vmatpush1.bf16.msra.mxu0 %v1653
    %2246 = vmatprep.subr.bf16.mxu0 %v1658
    %2247 = vmatpush1.bf16.msra.mxu0 %v1657
    %2248 = vmatprep.mubr.bf16.mxu0 %v356
    %2249 = vmatmul.mubr.bf16.gmra.mrb[0].mxu0 %v355
    %v2250 = vpop.f32.mrb[0].mxu0
    %v2251 = vadd.f32 %v2208, %v2250
    %v2252 = vpop.f32.mrb[0].mxu0
    %v2253 = vadd.f32 %v2210, %v2252
    %v2254 = vpop.f32.mrb[0].mxu0
    %v2255 = vadd.f32 %v2212, %v2254
    %v2256 = vpop.f32.mrb[0].mxu0
    %v2257 = vadd.f32 %v2214, %v2256
    %2258 = vdwg.mxu0
    %v2259 = vpack.c.bf16 %v2083, %v2079
    %v2260 = vpack.c.bf16 %v2085, %v2081
    %v2261 = vpack.c.bf16 %v2255, %v2251
    %v2262 = vpack.c.bf16 %v2257, %v2253
    %v2263 = vmax.bf16 %v2259, 0
    %v2264 = vmax.bf16 %v2260, 0
    %v2265 = vmax.bf16 %v2261, 0
    %v2266 = vmax.bf16 %v2262, 0
    %v2267 = vld [vmem:[#allocation7] sm:$0xf]
    %v2268 = vld [vmem:[#allocation7 + $0x4] sm:$0xf]
    %v2269 = vld [vmem:[#allocation7 + $0x8] sm:$0xf]
    %v2270 = vld [vmem:[#allocation7 + $0xc] sm:$0xf]
    %v2271 = vld [vmem:[#allocation7 + $0x10] sm:$0xf]
    %v2272 = vld [vmem:[#allocation7 + $0x14] sm:$0xf]
    %v2273 = vld [vmem:[#allocation7 + $0x18] sm:$0xf]
    %v2274 = vld [vmem:[#allocation7 + $0x1c] sm:$0xf]
    %v2275 = vld [vmem:[#allocation7 + $0x20] sm:$0xf]
    %v2276 = vld [vmem:[#allocation7 + $0x24] sm:$0xf]
    %v2277 = vld [vmem:[#allocation7 + $0x28] sm:$0xf]
    %v2278 = vld [vmem:[#allocation7 + $0x2c] sm:$0xf]
    %v2279 = vld [vmem:[#allocation7 + $0x30] sm:$0xf]
    %v2280 = vld [vmem:[#allocation7 + $0x34] sm:$0xf]
    %v2281 = vld [vmem:[#allocation7 + $0x38] sm:$0xf]
    %v2282 = vld [vmem:[#allocation7 + $0x3c] sm:$0xf]
    %v2283 = vld [vmem:[#allocation7 + $0x40] sm:$0xf]
    %v2284 = vld [vmem:[#allocation7 + $0x44] sm:$0xf]
    %v2285 = vld [vmem:[#allocation7 + $0x48] sm:$0xf]
    %v2286 = vld [vmem:[#allocation7 + $0x4c] sm:$0xf]
    %v2287 = vld [vmem:[#allocation7 + $0x50] sm:$0xf]
    %v2288 = vld [vmem:[#allocation7 + $0x54] sm:$0xf]
    %v2289 = vld [vmem:[#allocation7 + $0x58] sm:$0xf]
    %v2290 = vld [vmem:[#allocation7 + $0x5c] sm:$0xf]
    %v2291 = vld [vmem:[#allocation7 + $0x60] sm:$0xf]
    %v2292 = vld [vmem:[#allocation7 + $0x64] sm:$0xf]
    %v2293 = vld [vmem:[#allocation7 + $0x68] sm:$0xf]
    %v2294 = vld [vmem:[#allocation7 + $0x6c] sm:$0xf]
    %v2295 = vld [vmem:[#allocation7 + $0x70] sm:$0xf]
    %v2296 = vld [vmem:[#allocation7 + $0x74] sm:$0xf]
    %v2297 = vld [vmem:[#allocation7 + $0x78] sm:$0xf]
    %v2298 = vld [vmem:[#allocation7 + $0x7c] sm:$0xf]
    %v2299 = vld [vmem:[#allocation7 + $0x80] sm:$0xf]
    %v2300 = vld [vmem:[#allocation7 + $0x84] sm:$0xf]
    %v2301 = vld [vmem:[#allocation7 + $0x88] sm:$0xf]
    %v2302 = vld [vmem:[#allocation7 + $0x8c] sm:$0xf]
    %v2303 = vld [vmem:[#allocation7 + $0x90] sm:$0xf]
    %v2304 = vld [vmem:[#allocation7 + $0x94] sm:$0xf]
    %v2305 = vld [vmem:[#allocation7 + $0x98] sm:$0xf]
    %v2306 = vld [vmem:[#allocation7 + $0x9c] sm:$0xf]
    %v2307 = vld [vmem:[#allocation7 + $0xa0] sm:$0xf]
    %v2308 = vld [vmem:[#allocation7 + $0xa4] sm:$0xf]
    %v2309 = vld [vmem:[#allocation7 + $0xa8] sm:$0xf]
    %v2310 = vld [vmem:[#allocation7 + $0xac] sm:$0xf]
    %v2311 = vld [vmem:[#allocation7 + $0xb0] sm:$0xf]
    %v2312 = vld [vmem:[#allocation7 + $0xb4] sm:$0xf]
    %v2313 = vld [vmem:[#allocation7 + $0xb8] sm:$0xf]
    %v2314 = vld [vmem:[#allocation7 + $0xbc] sm:$0xf]
    %v2315 = vld [vmem:[#allocation7 + $0xc0] sm:$0xf]
    %v2316 = vld [vmem:[#allocation7 + $0xc4] sm:$0xf]
    %v2317 = vld [vmem:[#allocation7 + $0xc8] sm:$0xf]
    %v2318 = vld [vmem:[#allocation7 + $0xcc] sm:$0xf]
    %v2319 = vld [vmem:[#allocation7 + $0xd0] sm:$0xf]
    %v2320 = vld [vmem:[#allocation7 + $0xd4] sm:$0xf]
    %v2321 = vld [vmem:[#allocation7 + $0xd8] sm:$0xf]
    %v2322 = vld [vmem:[#allocation7 + $0xdc] sm:$0xf]
    %v2323 = vld [vmem:[#allocation7 + $0xe0] sm:$0xf]
    %v2324 = vld [vmem:[#allocation7 + $0xe4] sm:$0xf]
    %v2325 = vld [vmem:[#allocation7 + $0xe8] sm:$0xf]
    %v2326 = vld [vmem:[#allocation7 + $0xec] sm:$0xf]
    %v2327 = vld [vmem:[#allocation7 + $0xf0] sm:$0xf]
    %v2328 = vld [vmem:[#allocation7 + $0xf4] sm:$0xf]
    %v2329 = vld [vmem:[#allocation7 + $0xf8] sm:$0xf]
    %v2330 = vld [vmem:[#allocation7 + $0xfc] sm:$0xf]
    %v2331 = vld [vmem:[%s6] sm:$0x1]
    %v2333 = vlaneseq
    %v2334 = vshrl.u32 %v2333, 7
    %v2335 = vsub.s32 0, %v2334
    %v2336 = vrot.slane %v2331, %v2335
    %v2402 = vunpack.c.l.b16 %v2267
    %v2403 = vunpack.c.l.b16 %v2268
    %v2404 = vunpack.c.l.b16 %v2269
    %v2405 = vunpack.c.l.b16 %v2270
    %v2406 = vunpack.c.l.b16 %v2271
    %v2407 = vunpack.c.l.b16 %v2272
    %v2408 = vunpack.c.l.b16 %v2273
    %v2409 = vunpack.c.l.b16 %v2274
    %v2410 = vunpack.c.l.b16 %v2275
    %v2411 = vunpack.c.l.b16 %v2276
    %v2412 = vunpack.c.l.b16 %v2277
    %v2413 = vunpack.c.l.b16 %v2278
    %v2414 = vunpack.c.l.b16 %v2279
    %v2415 = vunpack.c.l.b16 %v2280
    %v2416 = vunpack.c.l.b16 %v2281
    %v2417 = vunpack.c.l.b16 %v2282
    %v2418 = vunpack.c.l.b16 %v2283
    %v2419 = vunpack.c.l.b16 %v2284
    %v2420 = vunpack.c.l.b16 %v2285
    %v2421 = vunpack.c.l.b16 %v2286
    %v2422 = vunpack.c.l.b16 %v2287
    %v2423 = vunpack.c.l.b16 %v2288
    %v2424 = vunpack.c.l.b16 %v2289
    %v2425 = vunpack.c.l.b16 %v2290
    %v2426 = vunpack.c.l.b16 %v2291
    %v2427 = vunpack.c.l.b16 %v2292
    %v2428 = vunpack.c.l.b16 %v2293
    %v2429 = vunpack.c.l.b16 %v2294
    %v2430 = vunpack.c.l.b16 %v2295
    %v2431 = vunpack.c.l.b16 %v2296
    %v2432 = vunpack.c.l.b16 %v2297
    %v2433 = vunpack.c.l.b16 %v2298
    %v2434 = vunpack.c.l.b16 %v2299
    %v2435 = vunpack.c.l.b16 %v2300
    %v2436 = vunpack.c.l.b16 %v2301
    %v2437 = vunpack.c.l.b16 %v2302
    %v2438 = vunpack.c.l.b16 %v2303
    %v2439 = vunpack.c.l.b16 %v2304
    %v2440 = vunpack.c.l.b16 %v2305
    %v2441 = vunpack.c.l.b16 %v2306
    %v2442 = vunpack.c.l.b16 %v2307
    %v2443 = vunpack.c.l.b16 %v2308
    %v2444 = vunpack.c.l.b16 %v2309
    %v2445 = vunpack.c.l.b16 %v2310
    %v2446 = vunpack.c.l.b16 %v2311
    %v2447 = vunpack.c.l.b16 %v2312
    %v2448 = vunpack.c.l.b16 %v2313
    %v2449 = vunpack.c.l.b16 %v2314
    %v2450 = vunpack.c.l.b16 %v2315
    %v2451 = vunpack.c.l.b16 %v2316
    %v2452 = vunpack.c.l.b16 %v2317
    %v2453 = vunpack.c.l.b16 %v2318
    %v2454 = vunpack.c.l.b16 %v2319
    %v2455 = vunpack.c.l.b16 %v2320
    %v2456 = vunpack.c.l.b16 %v2321
    %v2457 = vunpack.c.l.b16 %v2322
    %v2458 = vunpack.c.l.b16 %v2323
    %v2459 = vunpack.c.l.b16 %v2324
    %v2460 = vunpack.c.l.b16 %v2325
    %v2461 = vunpack.c.l.b16 %v2326
    %v2462 = vunpack.c.l.b16 %v2327
    %v2463 = vunpack.c.l.b16 %v2328
    %v2464 = vunpack.c.l.b16 %v2329
    %v2465 = vunpack.c.l.b16 %v2330
    %v2466 = vpack.c.b16 %v2403, %v2402
    %v2467 = vpack.c.b16 %v2405, %v2404
    %v2468 = vpack.c.b16 %v2407, %v2406
    %v2469 = vpack.c.b16 %v2409, %v2408
    %v2470 = vpack.c.b16 %v2411, %v2410
    %v2471 = vpack.c.b16 %v2413, %v2412
    %v2472 = vpack.c.b16 %v2415, %v2414
    %v2473 = vpack.c.b16 %v2417, %v2416
    %v2474 = vpack.c.b16 %v2419, %v2418
    %v2475 = vpack.c.b16 %v2421, %v2420
    %v2476 = vpack.c.b16 %v2423, %v2422
    %v2477 = vpack.c.b16 %v2425, %v2424
    %v2478 = vpack.c.b16 %v2427, %v2426
    %v2479 = vpack.c.b16 %v2429, %v2428
    %v2480 = vpack.c.b16 %v2431, %v2430
    %v2481 = vpack.c.b16 %v2433, %v2432
    %v2482 = vpack.c.b16 %v2435, %v2434
    %v2483 = vpack.c.b16 %v2437, %v2436
    %v2484 = vpack.c.b16 %v2439, %v2438
    %v2485 = vpack.c.b16 %v2441, %v2440
    %v2486 = vpack.c.b16 %v2443, %v2442
    %v2487 = vpack.c.b16 %v2445, %v2444
    %v2488 = vpack.c.b16 %v2447, %v2446
    %v2489 = vpack.c.b16 %v2449, %v2448
    %v2490 = vpack.c.b16 %v2451, %v2450
    %v2491 = vpack.c.b16 %v2453, %v2452
    %v2492 = vpack.c.b16 %v2455, %v2454
    %v2493 = vpack.c.b16 %v2457, %v2456
    %v2494 = vpack.c.b16 %v2459, %v2458
    %v2495 = vpack.c.b16 %v2461, %v2460
    %v2496 = vpack.c.b16 %v2463, %v2462
    %v2497 = vpack.c.b16 %v2465, %v2464
    %2530 = vmatprep.subr.bf16.mxu0 0
    %2531 = vmatpush1.bf16.msra.mxu0 %v2466
    %2532 = vmatprep.subr.bf16.mxu0 0
    %2533 = vmatpush1.bf16.msra.mxu0 %v2467
    %2534 = vmatprep.subr.bf16.mxu0 0
    %2535 = vmatpush1.bf16.msra.mxu0 %v2468
    %2536 = vmatprep.subr.bf16.mxu0 0
    %2537 = vmatpush1.bf16.msra.mxu0 %v2469
    %2538 = vmatprep.subr.bf16.mxu0 0
    %2539 = vmatpush1.bf16.msra.mxu0 %v2470
    %2540 = vmatprep.subr.bf16.mxu0 0
    %2541 = vmatpush1.bf16.msra.mxu0 %v2471
    %2542 = vmatprep.subr.bf16.mxu0 0
    %2543 = vmatpush1.bf16.msra.mxu0 %v2472
    %2544 = vmatprep.subr.bf16.mxu0 0
    %2545 = vmatpush1.bf16.msra.mxu0 %v2473
    %2546 = vmatprep.subr.bf16.mxu0 0
    %2547 = vmatpush1.bf16.msra.mxu0 %v2474
    %2548 = vmatprep.subr.bf16.mxu0 0
    %2549 = vmatpush1.bf16.msra.mxu0 %v2475
    %2550 = vmatprep.subr.bf16.mxu0 0
    %2551 = vmatpush1.bf16.msra.mxu0 %v2476
    %2552 = vmatprep.subr.bf16.mxu0 0
    %2553 = vmatpush1.bf16.msra.mxu0 %v2477
    %2554 = vmatprep.subr.bf16.mxu0 0
    %2555 = vmatpush1.bf16.msra.mxu0 %v2478
    %2556 = vmatprep.subr.bf16.mxu0 0
    %2557 = vmatpush1.bf16.msra.mxu0 %v2479
    %2558 = vmatprep.subr.bf16.mxu0 0
    %2559 = vmatpush1.bf16.msra.mxu0 %v2480
    %2560 = vmatprep.subr.bf16.mxu0 0
    %2561 = vmatpush1.bf16.msra.mxu0 %v2481
    %2562 = vmatprep.mubr.bf16.mxu0 %v2264
    %2563 = vmatmul.mubr.bf16.gmra.mrb[0].mxu0 %v2263
    %v2564 = vpop.f32.mrb[0].mxu0
    %v2565 = vadd.f32 %v2336, %v2564
    %v2566 = vpop.f32.mrb[0].mxu0
    %v2567 = vpop.f32.mrb[0].mxu0
    %v2568 = vadd.f32 %v2336, %v2567
    %v2569 = vpop.f32.mrb[0].mxu0
    %2570 = vdwg.mxu0
    %2571 = vmatprep.subr.bf16.mxu0 0
    %2572 = vmatpush1.bf16.msra.mxu0 %v2482
    %2573 = vmatprep.subr.bf16.mxu0 0
    %2574 = vmatpush1.bf16.msra.mxu0 %v2483
    %2575 = vmatprep.subr.bf16.mxu0 0
    %2576 = vmatpush1.bf16.msra.mxu0 %v2484
    %2577 = vmatprep.subr.bf16.mxu0 0
    %2578 = vmatpush1.bf16.msra.mxu0 %v2485
    %2579 = vmatprep.subr.bf16.mxu0 0
    %2580 = vmatpush1.bf16.msra.mxu0 %v2486
    %2581 = vmatprep.subr.bf16.mxu0 0
    %2582 = vmatpush1.bf16.msra.mxu0 %v2487
    %2583 = vmatprep.subr.bf16.mxu0 0
    %2584 = vmatpush1.bf16.msra.mxu0 %v2488
    %2585 = vmatprep.subr.bf16.mxu0 0
    %2586 = vmatpush1.bf16.msra.mxu0 %v2489
    %2587 = vmatprep.subr.bf16.mxu0 0
    %2588 = vmatpush1.bf16.msra.mxu0 %v2490
    %2589 = vmatprep.subr.bf16.mxu0 0
    %2590 = vmatpush1.bf16.msra.mxu0 %v2491
    %2591 = vmatprep.subr.bf16.mxu0 0
    %2592 = vmatpush1.bf16.msra.mxu0 %v2492
    %2593 = vmatprep.subr.bf16.mxu0 0
    %2594 = vmatpush1.bf16.msra.mxu0 %v2493
    %2595 = vmatprep.subr.bf16.mxu0 0
    %2596 = vmatpush1.bf16.msra.mxu0 %v2494
    %2597 = vmatprep.subr.bf16.mxu0 0
    %2598 = vmatpush1.bf16.msra.mxu0 %v2495
    %2599 = vmatprep.subr.bf16.mxu0 0
    %2600 = vmatpush1.bf16.msra.mxu0 %v2496
    %2601 = vmatprep.subr.bf16.mxu0 0
    %2602 = vmatpush1.bf16.msra.mxu0 %v2497
    %2603 = vmatprep.mubr.bf16.mxu0 %v2266
    %2604 = vmatmul.mubr.bf16.gmra.mrb[0].mxu0 %v2265
    %v2605 = vpop.f32.mrb[0].mxu0
    %v2606 = vadd.f32 %v2565, %v2605
    %v2607 = vpop.f32.mrb[0].mxu0
    %v2608 = vpop.f32.mrb[0].mxu0
    %v2609 = vadd.f32 %v2568, %v2608
    %v2610 = vpop.f32.mrb[0].mxu0
    %2611 = vdwg.mxu0
    %2612 = vst [vmem:[#allocation8] sm:$0xff] %v2606
    %2613 = vst [vmem:[#allocation8 + $0x8] sm:$0xff] %v2609
    // Predicated region
    $region42: #{tpu_custom_call.1} parent=1 // pred_check
      _
    $region43: #{tpu_custom_call.1} parent=1 // pred_check_branch
      %2615 = sbr.rel (0) target = $region45
    $region44: #{tpu_custom_call.1} parent=1 // pred_region
      %s2617 = ssub.s32 256, 256
      %2618 = vsyncadd [#allocation4], %s2617
      %s2619 = sshll.u32 [#allocation8], 4
      %s2620 = int_to_ptr.vmem [resolvable:$true] %s2619
      %2625 = dma.vmem_to_hbm [thread:$0]  %s2620, 256, %s7, [#allocation4], 128, 128, 8
    $region45: #{tpu_custom_call.1} parent=1 // pred_fallthru
      _
    // Predicated region
    $region46: #{tpu_custom_call.1} parent=1 // pred_check
      _
    $region47: #{tpu_custom_call.1} parent=1 // pred_check_branch
      %2627 = sbr.rel (0) target = $region49
    $region48: #{tpu_custom_call.1} parent=1 // pred_region
      %2628 = dma.done [#allocation4], 256
    $region49: #{tpu_custom_call.1} parent=1 // pred_fallthru
      _
    %2629 = vsyncpa [#allocation3], 1
    %2630 = vsyncpa [#allocation6], 1
    %2631 = vsyncpa [#allocation4], 1

</llo_original>
